<compile_context>
chip_gen: v5e
topology: v5e:2x2
jax: 0.10.0
libtpu: 0.0.40
codegen_flags: <defaults>
</compile_context>

<pallas_src>
import functools

import jax
import jax.numpy as jnp
from jax import lax
from jax.experimental import pallas as pl
from jax.experimental.pallas import tpu as pltpu


LN_EPS = 1e-6


def _rmsnorm_f32(x_f32, w_f32, eps):
    # T5LayerNorm: x / sqrt(mean(x^2) + eps) * weight (no mean subtraction, no bias)
    var = jnp.mean(x_f32 * x_f32, axis=-1, keepdims=True)
    return w_f32 * (x_f32 * lax.rsqrt(var + eps))


# ---------------------------------------------------------------------------
# Fused T5Block kernel: rmsnorm -> fused QKV -> per-head attention (+O accumulated) ->
#                       residual -> rmsnorm -> d_ff-tiled FF -> residual
# grid = (B,): one batch element per grid step ("parallel" for megacore).
# ---------------------------------------------------------------------------
def _t5_block_kernel(*refs, n_heads, d_kv, ff_tile, eps, has_bias, compute_dtype):
    it = iter(refs)
    x_ref = next(it)                                     # (1, S, D)
    mask_ref = next(it)                                  # (1, 1, S)
    bias_ref = next(it) if has_bias else None            # (H, S, S)  (batch dim squeezed)
    ln1_ref = next(it)                                   # (1, D)  f32
    wqkv_ref = next(it)                                  # (D, 3*inner)
    wo_ref = next(it)                                    # (inner, D)
    ln2_ref = next(it)                                   # (1, D)  f32
    wi_ref = next(it)                                    # (D, d_ff)
    wo2_ref = next(it)                                   # (d_ff, D)
    out_ref = next(it)                                   # (1, S, D)
    qkv_s = next(it)                                     # (S, 3*inner) compute dtype
    acc_s = next(it)                                     # (S, D) f32  (attn & FF accumulator)

    cdtype = compute_dtype
    inner = n_heads * d_kv
    d_ff = wi_ref.shape[1]

    x = x_ref[0].astype(jnp.float32)                     # (S, D) f32 for norms / residuals
    xn_c = _rmsnorm_f32(x, ln1_ref[0].astype(jnp.float32), eps).astype(cdtype)

    # ---- fused QKV: one wide MXU pass, heads folded into the lane dimension ---------
    qkv_s[...] = jnp.dot(xn_c, wqkv_ref[...],
                         preferred_element_type=jnp.float32).astype(qkv_s.dtype)

    # additive key mask from the (1, S) keep-mask, f32 so masked logits stay masked
    mask_bias = (1.0 - mask_ref[0].astype(jnp.float32)) * jnp.float32(-1e9)   # (1, S)

    acc_s[...] = jnp.zeros_like(acc_s)                   # attention output accumulator

    for h in range(n_heads):                             # small static head count
        lo = h * d_kv
        qh = qkv_s[:, lo:lo + d_kv]                      # (S, dk)
        kh = qkv_s[:, inner + lo:inner + lo + d_kv]
        vh = qkv_s[:, 2 * inner + lo:2 * inner + lo + d_kv]

        # q @ k^T with no explicit transpose; T5 does not scale by 1/sqrt(dk)
        scores = lax.dot_general(qh, kh, (((1,), (1,)), ((), ())),
                                 preferred_element_type=jnp.float32)          # (S, S) f32
        if has_bias:
            scores = scores + bias_ref[h].astype(jnp.float32)
        scores = scores + mask_bias

        m = jnp.max(scores, axis=-1, keepdims=True)
        p = jnp.exp(scores - m)
        denom = jnp.sum(p, axis=-1, keepdims=True)
        # approx reciprocal on the EUP slot (~2^-12 rel error; covered by tolerances)
        w = (p * pl.reciprocal(denom, approx=True)).astype(cdtype)

        ctx = jnp.dot(w, vh, preferred_element_type=jnp.float32).astype(cdtype)  # (S, dk)
        # Fold the O-projection into the head loop: Wo rows are a cheap sublane slice
        # and no (S, inner) context scratch / masked lane stores are needed.
        acc_s[...] += jnp.dot(ctx, wo_ref[lo:lo + d_kv, :],
                              preferred_element_type=jnp.float32)

    h1 = x + acc_s[...]                                  # residual (f32; dropout = identity)

    # ---- feed-forward, tiled over d_ff: (S, d_ff) f32 intermediate never materializes --
    hn = _rmsnorm_f32(h1, ln2_ref[0].astype(jnp.float32), eps).astype(cdtype)
    acc_s[...] = jnp.zeros_like(acc_s)                   # reuse the accumulator for FF
    for c in range(d_ff // ff_tile):
        co = c * ff_tile
        act = jnp.maximum(jnp.dot(hn, wi_ref[:, co:co + ff_tile],
                                  preferred_element_type=jnp.float32), 0.0)
        acc_s[...] += jnp.dot(act.astype(cdtype), wo2_ref[co:co + ff_tile, :],
                              preferred_element_type=jnp.float32)

    out_ref[0] = (h1 + acc_s[...]).astype(out_ref.dtype)


def _vmem_limit_bytes():
    cap = 128 * 1024 * 1024
    try:
        info = pltpu.get_tpu_info()
        cap = int(getattr(info, "vmem_capacity_bytes", cap) or cap)
    except Exception:
        pass
    # leave ~25% pipeline headroom: ~96 MiB on v5e/v6e (128 MiB), ~48 MiB on v7x (64 MiB)
    return max(32 * 1024 * 1024, min(cap * 3 // 4, 100 * 1024 * 1024))


# ---------------------------------------------------------------------------
# T5Block forward (encoder: self-attention layer + FF layer).
# Weights: wq/wk/wv (D, H*dk) (concatenated to one (D, 3*H*dk) operand), wo (H*dk, D).
# attention_mask is a 0/1 keep-mask of shape (B, S) (NOT a HuggingFace additive mask).
# ---------------------------------------------------------------------------
def t5_block_forward(params, hidden_states, attention_mask=None, position_bias=None,
                     use_cache=False, eps=LN_EPS, compute_dtype=None):
    B, S, D = hidden_states.shape
    H = int(params["n_heads"])
    inner = params["wq"].shape[1]
    d_kv = inner // H
    d_ff = params["wi"].shape[1]
    # MXU operand dtype. Default: the model dtype (f32 fallback documented); pass
    # compute_dtype=jnp.bfloat16 on v6e/v7x for the full bf16 MXU rate (f32 accumulation).
    cdtype = jnp.dtype(compute_dtype) if compute_dtype is not None else hidden_states.dtype

    # FF chunk width: <=512 lanes, multiple of 128 when possible.
    ff_tile = d_ff
    for cand in (512, 256, 128):
        if d_ff % cand == 0:
            ff_tile = cand
            break

    # small (B, 1, S) keep-mask applied additively inside the kernel in f32
    if attention_mask is None:
        mask = jnp.ones((B, 1, S), cdtype)
    else:
        mask = attention_mask.reshape(B, 1, S).astype(cdtype)

    single = pl.Buffered(1)   # grid-invariant operands: no pointless double-buffering

    operands = [hidden_states, mask]
    in_specs = [
        pl.BlockSpec((1, S, D), lambda b: (b, 0, 0)),           # hidden states
        pl.BlockSpec((1, 1, S), lambda b: (b, 0, 0)),           # keep-mask
    ]

    has_bias = position_bias is not None
    bias_bytes = 0
    if has_bias:
        pos_bias = position_bias
        if pos_bias.ndim == 3:
            pos_bias = pos_bias[None]
        pos_bias = pos_bias.astype(cdtype)       # bf16 bias halves DMA/VMEM when cdtype=bf16
        operands.append(pos_bias)
        bias_bytes = pos_bias.size * pos_bias.dtype.itemsize
        if pos_bias.shape[0] > 1:                # per-batch bias
            in_specs.append(pl.BlockSpec((pl.Squeezed(), H, S, S),
                                         lambda b: (b, 0, 0, 0)))
        else:                                    # batch-invariant: DMA once, single-buffered
            in_specs.append(pl.BlockSpec((pl.Squeezed(), H, S, S),
                                         lambda b: (0, 0, 0, 0), pipeline_mode=single))

    ln1 = params["ln1"].reshape(1, D).astype(jnp.float32)
    ln2 = params["ln2"].reshape(1, D).astype(jnp.float32)
    wqkv = jnp.concatenate([params["wq"], params["wk"], params["wv"]], axis=1).astype(cdtype)
    wo = params["wo"].astype(cdtype)
    wi = params["wi"].astype(cdtype)
    wo_ff = params["wo_ff"].astype(cdtype)

    operands += [ln1, wqkv, wo, ln2, wi, wo_ff]
    in_specs += [
        pl.BlockSpec((1, D), lambda b: (0, 0), pipeline_mode=single),           # ln1
        pl.BlockSpec((D, 3 * inner), lambda b: (0, 0), pipeline_mode=single),   # W_qkv fused
        pl.BlockSpec((inner, D), lambda b: (0, 0), pipeline_mode=single),       # W_o
        pl.BlockSpec((1, D), lambda b: (0, 0), pipeline_mode=single),           # ln2
        pl.BlockSpec((D, d_ff), lambda b: (0, 0), pipeline_mode=single),        # W_i
        pl.BlockSpec((d_ff, D), lambda b: (0, 0), pipeline_mode=single),        # W_o (FF)
    ]

    flops = 2 * B * S * (3 * D * inner + 2 * S * inner + inner * D + 2 * D * d_ff)
    transcendentals = B * H * S * S
    bytes_accessed = int(
        2 * hidden_states.size * hidden_states.dtype.itemsize
        + mask.size * mask.dtype.itemsize + bias_bytes
        + sum(w.size * w.dtype.itemsize for w in (ln1, wqkv, wo, ln2, wi, wo_ff)))

    kernel = functools.partial(
        _t5_block_kernel, n_heads=H, d_kv=d_kv, ff_tile=ff_tile, eps=eps,
        has_bias=has_bias, compute_dtype=cdtype)

    out = pl.pallas_call(
        kernel,
        out_shape=jax.ShapeDtypeStruct((B, S, D), hidden_states.dtype),
        grid=(B,),   # TODO(synk): add a q-tile/head "parallel" axis so v7x's 2 TCs stay busy at B=1
        in_specs=in_specs,
        out_specs=pl.BlockSpec((1, S, D), lambda b: (b, 0, 0)),
        scratch_shapes=[
            pltpu.VMEM((S, 3 * inner), cdtype),   # fused Q|K|V
            pltpu.VMEM((S, D), jnp.float32),      # shared attention / FF accumulator
        ],
        compiler_params=pltpu.CompilerParams(
            dimension_semantics=("parallel",),
            vmem_limit_bytes=_vmem_limit_bytes()),
        cost_estimate=pl.CostEstimate(flops=int(flops),
                                      transcendentals=int(transcendentals),
                                      bytes_accessed=bytes_accessed),
    )(*operands)

    present_key_value_state = None   # encoder, use_cache=False
    # TODO(synk): decoder branch (cross-attention + past_key_value_state cache) not
    # implemented; outputs mirror (hidden_states, present_key_value_state).
    return (out, present_key_value_state)


# ---------------------------------------------------------------------------
# Pure-JAX reference for verification
# ---------------------------------------------------------------------------
def t5_block_ref(params, x, attention_mask=None, position_bias=None, eps=LN_EPS):
    B, S, D = x.shape
    H = int(params["n_heads"])
    inner = params["wq"].shape[1]
    dk = inner // H

    def rms(v, w):
        var = jnp.mean(v * v, axis=-1, keepdims=True)
        return w * (v * lax.rsqrt(var + eps))

    mask = attention_mask if attention_mask is not None else jnp.ones((B, S), jnp.float32)
    bias = position_bias if position_bias is not None else jnp.zeros((1, H, S, S), jnp.float32)
    bias = bias + (1.0 - mask.astype(jnp.float32))[:, None, None, :] * -1e9

    xn = rms(x, params["ln1"])
    q = (xn @ params["wq"]).reshape(B, S, H, dk).transpose(0, 2, 1, 3)
    k = (xn @ params["wk"]).reshape(B, S, H, dk).transpose(0, 2, 1, 3)
    v = (xn @ params["wv"]).reshape(B, S, H, dk).transpose(0, 2, 1, 3)
    scores = jnp.einsum('bhqe,bhke->bhqk', q, k) + bias
    w = jax.nn.softmax(scores, axis=-1)
    ctx = jnp.einsum('bhqk,bhke->bhqe', w, v)
    ctx = ctx.transpose(0, 2, 1, 3).reshape(B, S, inner)
    h1 = x + ctx @ params["wo"]
    hn = rms(h1, params["ln2"])
    ff = jnp.maximum(hn @ params["wi"], 0.0) @ params["wo_ff"]
    return h1 + ff


# ---------------------------------------------------------------------------
if __name__ == "__main__":
    # Small T5 config: d_model=32, n_heads=4, d_kv=8, d_ff=64; batch=2, seq=8.
    B, S, D, H, DK, DFF = 2, 8, 32, 4, 8, 64
    INNER = H * DK

    key = jax.random.PRNGKey(0)
    ks = jax.random.split(key, 9)
    init = lambda k, shape: (0.05 * jax.random.normal(k, shape)).astype(jnp.float32)

    params = {
        "n_heads": H,
        "ln1": jnp.ones((D,), jnp.float32),
        "wq": init(ks[0], (D, INNER)),
        "wk": init(ks[1], (D, INNER)),
        "wv": init(ks[2], (D, INNER)),
        "wo": init(ks[3], (INNER, D)),
        "ln2": jnp.ones((D,), jnp.float32),
        "wi": init(ks[4], (D, DFF)),
        "wo_ff": init(ks[5], (DFF, D)),
    }

    hidden_states = jax.random.normal(ks[6], (B, S, D), jnp.float32)
    # attention mask: first example full length, second example length 5
    lengths = jnp.array([S, 5])
    attention_mask = (jnp.arange(S)[None, :] < lengths[:, None]).astype(jnp.float32)

    # 1) no-bias variant (bias operand dropped entirely), f32 compute
    out, present = t5_block_forward(params, hidden_states, attention_mask)
    out = jax.block_until_ready(out)
    ref = t5_block_ref(params, hidden_states, attention_mask)
    assert out.shape == (B, S, D)
    err = jnp.max(jnp.abs(out - ref))
    assert jnp.allclose(out, ref, atol=2e-3, rtol=2e-3), f"no-bias max err {err}"

    # 2) with a (1, H, S, S) position bias, f32 compute
    pos_bias = 0.1 * jax.random.normal(ks[7], (1, H, S, S), jnp.float32)
    out_b, _ = t5_block_forward(params, hidden_states, attention_mask,
                                position_bias=pos_bias)
    out_b = jax.block_until_ready(out_b)
    ref_b = t5_block_ref(params, hidden_states, attention_mask, position_bias=pos_bias)
    err_b = jnp.max(jnp.abs(out_b - ref_b))
    assert jnp.allclose(out_b, ref_b, atol=2e-3, rtol=2e-3), f"bias max err {err_b}"

    # 3) bf16 MXU-operand path (f32 accumulation), compared loosely to the f32 reference
    out_bf, _ = t5_block_forward(params, hidden_states, attention_mask,
                                 compute_dtype=jnp.bfloat16)
    out_bf = jax.block_until_ready(out_bf)
    err_bf = jnp.max(jnp.abs(out_bf.astype(jnp.float32) - ref))
    assert jnp.allclose(out_bf.astype(jnp.float32), ref, atol=5e-2, rtol=5e-2), \
        f"bf16 max err {err_bf}"

    print("KERNEL_OK")
</pallas_src>

<mosaic_0001>
module attributes {stable_mosaic.version = 11 : i64} {
  func.func @_t5_block_kernel(%arg0: i32, %arg1: memref<1x8x32xf32, #tpu.memory_space<vmem>>, %arg2: memref<1x1x8xf32, #tpu.memory_space<vmem>>, %arg3: memref<1x32xf32, #tpu.memory_space<vmem>>, %arg4: memref<32x96xf32, #tpu.memory_space<vmem>>, %arg5: memref<32x32xf32, #tpu.memory_space<vmem>>, %arg6: memref<1x32xf32, #tpu.memory_space<vmem>>, %arg7: memref<32x64xf32, #tpu.memory_space<vmem>>, %arg8: memref<64x32xf32, #tpu.memory_space<vmem>>, %arg9: memref<1x8x32xf32, #tpu.memory_space<vmem>>, %arg10: memref<8x96xf32, #tpu.memory_space<vmem>>, %arg11: memref<8x32xf32, #tpu.memory_space<vmem>>) attributes {dimension_semantics = [#tpu.dimension_semantics<parallel>], iteration_bounds = array<i64: 2>, scalar_prefetch = 0 : i64, scratch_operands = 2 : i64, tpu.core_type = #tpu.core_type<tc>, window_params = [{transform_indices = @transform_0, window_bounds = array<i64: 1, 8, 32>}, {transform_indices = @transform_1, window_bounds = array<i64: 1, 1, 8>}, {pipeline_mode = #tpu.pipeline_mode<synchronous>, transform_indices = @transform_2, window_bounds = array<i64: 1, 32>}, {pipeline_mode = #tpu.pipeline_mode<synchronous>, transform_indices = @transform_3, window_bounds = array<i64: 32, 96>}, {pipeline_mode = #tpu.pipeline_mode<synchronous>, transform_indices = @transform_4, window_bounds = array<i64: 32, 32>}, {pipeline_mode = #tpu.pipeline_mode<synchronous>, transform_indices = @transform_5, window_bounds = array<i64: 1, 32>}, {pipeline_mode = #tpu.pipeline_mode<synchronous>, transform_indices = @transform_6, window_bounds = array<i64: 32, 64>}, {pipeline_mode = #tpu.pipeline_mode<synchronous>, transform_indices = @transform_7, window_bounds = array<i64: 64, 32>}, {transform_indices = @transform_8, window_bounds = array<i64: 1, 8, 32>}]} {
    %c0 = arith.constant 0 : index
    %c0_0 = arith.constant 0 : index
    %c0_1 = arith.constant 0 : index
    %0 = vector.load %arg1[%c0, %c0_0, %c0_1] : memref<1x8x32xf32, #tpu.memory_space<vmem>>, vector<1x8x32xf32>
    %1 = vector.shape_cast %0 : vector<1x8x32xf32> to vector<8x32xf32>
    %c0_2 = arith.constant 0 : index
    %c0_3 = arith.constant 0 : index
    %2 = vector.load %arg3[%c0_2, %c0_3] : memref<1x32xf32, #tpu.memory_space<vmem>>, vector<1x32xf32>
    %3 = vector.shape_cast %2 : vector<1x32xf32> to vector<32xf32>
    %4 = arith.mulf %1, %1 : vector<8x32xf32>
    %cst = arith.constant dense<0.000000e+00> : vector<8xf32>
    %5 = vector.multi_reduction <add>, %4, %cst [1] : vector<8x32xf32> to vector<8xf32>
    %6 = vector.shape_cast %5 : vector<8xf32> to vector<8x1xf32>
    %cst_4 = arith.constant 3.200000e+01 : f32
    %7 = vector.broadcast %cst_4 : f32 to vector<8x1xf32>
    %8 = arith.divf %6, %7 : vector<8x1xf32>
    %cst_5 = arith.constant 9.99999997E-7 : f32
    %9 = vector.broadcast %cst_5 : f32 to vector<8x1xf32>
    %10 = arith.addf %8, %9 : vector<8x1xf32>
    %11 = math.rsqrt %10 : vector<8x1xf32>
    %12 = vector.broadcast %11 : vector<8x1xf32> to vector<8x32xf32>
    %13 = arith.mulf %1, %12 : vector<8x32xf32>
    %14 = vector.shape_cast %3 : vector<32xf32> to vector<1x32xf32>
    %15 = vector.broadcast %14 : vector<1x32xf32> to vector<8x32xf32>
    %16 = arith.mulf %15, %13 : vector<8x32xf32>
    %c0_6 = arith.constant 0 : index
    %c0_7 = arith.constant 0 : index
    %17 = vector.load %arg4[%c0_6, %c0_7] : memref<32x96xf32, #tpu.memory_space<vmem>>, vector<32x96xf32>
    %cst_8 = arith.constant dense<0.000000e+00> : vector<8x96xf32>
    %18 = tpu.matmul %16, %17, %cst_8 {dimension_numbers = #tpu.dot_dimension_numbers<[1], [0], [0], [1], [0, 0, 1, 1], [], []>} : vector<8x32xf32>, vector<32x96xf32>, vector<8x96xf32> -> vector<8x96xf32>
    %c0_9 = arith.constant 0 : index
    %c0_10 = arith.constant 0 : index
    %19 = vector.load %arg10[%c0_9, %c0_10] : memref<8x96xf32, #tpu.memory_space<vmem>>, vector<8x96xf32>
    tpu.vector_store %arg10[%c0_9, %c0_10], %18 {strides = array<i32>} : memref<8x96xf32, #tpu.memory_space<vmem>>, vector<8x96xf32>,
    %c0_11 = arith.constant 0 : index
    %c0_12 = arith.constant 0 : index
    %c0_13 = arith.constant 0 : index
    %20 = vector.load %arg2[%c0_11, %c0_12, %c0_13] : memref<1x1x8xf32, #tpu.memory_space<vmem>>, vector<1x1x8xf32>
    %21 = vector.shape_cast %20 : vector<1x1x8xf32> to vector<1x8xf32>
    %cst_14 = arith.constant 1.000000e+00 : f32
    %22 = vector.broadcast %cst_14 : f32 to vector<1x8xf32>
    %23 = arith.subf %22, %21 : vector<1x8xf32>
    %cst_15 = arith.constant -1.000000e+09 : f32
    %24 = vector.broadcast %cst_15 : f32 to vector<1x8xf32>
    %25 = arith.mulf %23, %24 : vector<1x8xf32>
    %cst_16 = arith.constant 0.000000e+00 : f32
    %26 = vector.broadcast %cst_16 : f32 to vector<8x32xf32>
    %c0_17 = arith.constant 0 : index
    %c0_18 = arith.constant 0 : index
    %27 = vector.load %arg11[%c0_17, %c0_18] : memref<8x32xf32, #tpu.memory_space<vmem>>, vector<8x32xf32>
    tpu.vector_store %arg11[%c0_17, %c0_18], %26 {strides = array<i32>} : memref<8x32xf32, #tpu.memory_space<vmem>>, vector<8x32xf32>,
    %c0_19 = arith.constant 0 : index
    %c0_20 = arith.constant 0 : index
    %28 = vector.load %arg10[%c0_19, %c0_20] : memref<8x96xf32, #tpu.memory_space<vmem>>, vector<8x8xf32>
    %c0_21 = arith.constant 0 : index
    %c32 = arith.constant 32 : index
    %29 = vector.load %arg10[%c0_21, %c32] : memref<8x96xf32, #tpu.memory_space<vmem>>, vector<8x8xf32>
    %c0_22 = arith.constant 0 : index
    %c64 = arith.constant 64 : index
    %30 = vector.load %arg10[%c0_22, %c64] : memref<8x96xf32, #tpu.memory_space<vmem>>, vector<8x8xf32>
    %cst_23 = arith.constant dense<0.000000e+00> : vector<8x8xf32>
    %31 = tpu.matmul %28, %29, %cst_23 {dimension_numbers = #tpu.dot_dimension_numbers<[1], [1], [0], [0], [0, 0, 1, 0], [], []>} : vector<8x8xf32>, vector<8x8xf32>, vector<8x8xf32> -> vector<8x8xf32>
    %32 = vector.broadcast %25 : vector<1x8xf32> to vector<8x8xf32>
    %33 = arith.addf %31, %32 : vector<8x8xf32>
    %cst_24 = arith.constant dense<0xFF800000> : vector<8xf32>
    %34 = vector.multi_reduction <maximumf>, %33, %cst_24 [1] : vector<8x8xf32> to vector<8xf32>
    %35 = vector.shape_cast %34 : vector<8xf32> to vector<8x1xf32>
    %36 = vector.broadcast %35 : vector<8x1xf32> to vector<8x8xf32>
    %37 = arith.subf %33, %36 : vector<8x8xf32>
    %38 = math.exp %37 : vector<8x8xf32>
    %cst_25 = arith.constant dense<0.000000e+00> : vector<8xf32>
    %39 = vector.multi_reduction <add>, %38, %cst_25 [1] : vector<8x8xf32> to vector<8xf32>
    %40 = vector.shape_cast %39 : vector<8xf32> to vector<8x1xf32>
    %41 = tpu.reciprocal %40 {approx = true} : vector<8x1xf32> -> vector<8x1xf32>
    %42 = vector.broadcast %41 : vector<8x1xf32> to vector<8x8xf32>
    %43 = arith.mulf %38, %42 : vector<8x8xf32>
    %cst_26 = arith.constant dense<0.000000e+00> : vector<8x8xf32>
    %44 = tpu.matmul %43, %30, %cst_26 {dimension_numbers = #tpu.dot_dimension_numbers<[1], [0], [0], [1], [0, 0, 1, 1], [], []>} : vector<8x8xf32>, vector<8x8xf32>, vector<8x8xf32> -> vector<8x8xf32>
    %c0_27 = arith.constant 0 : index
    %c0_28 = arith.constant 0 : index
    %45 = vector.load %arg11[%c0_27, %c0_28] : memref<8x32xf32, #tpu.memory_space<vmem>>, vector<8x32xf32>
    %c0_29 = arith.constant 0 : index
    %c0_30 = arith.constant 0 : index
    %46 = vector.load %arg5[%c0_29, %c0_30] : memref<32x32xf32, #tpu.memory_space<vmem>>, vector<8x32xf32>
    %cst_31 = arith.constant dense<0.000000e+00> : vector<8x32xf32>
    %47 = tpu.matmul %44, %46, %cst_31 {dimension_numbers = #tpu.dot_dimension_numbers<[1], [0], [0], [1], [0, 0, 1, 1], [], []>} : vector<8x8xf32>, vector<8x32xf32>, vector<8x32xf32> -> vector<8x32xf32>
    %48 = arith.addf %45, %47 : vector<8x32xf32>
    %c0_32 = arith.constant 0 : index
    %c0_33 = arith.constant 0 : index
    %49 = vector.load %arg11[%c0_32, %c0_33] : memref<8x32xf32, #tpu.memory_space<vmem>>, vector<8x32xf32>
    tpu.vector_store %arg11[%c0_32, %c0_33], %48 {strides = array<i32>} : memref<8x32xf32, #tpu.memory_space<vmem>>, vector<8x32xf32>,
    %c0_34 = arith.constant 0 : index
    %c8 = arith.constant 8 : index
    %50 = vector.load %arg10[%c0_34, %c8] : memref<8x96xf32, #tpu.memory_space<vmem>>, vector<8x8xf32>
    %c0_35 = arith.constant 0 : index
    %c40 = arith.constant 40 : index
    %51 = vector.load %arg10[%c0_35, %c40] : memref<8x96xf32, #tpu.memory_space<vmem>>, vector<8x8xf32>
    %c0_36 = arith.constant 0 : index
    %c72 = arith.constant 72 : index
    %52 = vector.load %arg10[%c0_36, %c72] : memref<8x96xf32, #tpu.memory_space<vmem>>, vector<8x8xf32>
    %cst_37 = arith.constant dense<0.000000e+00> : vector<8x8xf32>
    %53 = tpu.matmul %50, %51, %cst_37 {dimension_numbers = #tpu.dot_dimension_numbers<[1], [1], [0], [0], [0, 0, 1, 0], [], []>} : vector<8x8xf32>, vector<8x8xf32>, vector<8x8xf32> -> vector<8x8xf32>
    %54 = vector.broadcast %25 : vector<1x8xf32> to vector<8x8xf32>
    %55 = arith.addf %53, %54 : vector<8x8xf32>
    %cst_38 = arith.constant dense<0xFF800000> : vector<8xf32>
    %56 = vector.multi_reduction <maximumf>, %55, %cst_38 [1] : vector<8x8xf32> to vector<8xf32>
    %57 = vector.shape_cast %56 : vector<8xf32> to vector<8x1xf32>
    %58 = vector.broadcast %57 : vector<8x1xf32> to vector<8x8xf32>
    %59 = arith.subf %55, %58 : vector<8x8xf32>
    %60 = math.exp %59 : vector<8x8xf32>
    %cst_39 = arith.constant dense<0.000000e+00> : vector<8xf32>
    %61 = vector.multi_reduction <add>, %60, %cst_39 [1] : vector<8x8xf32> to vector<8xf32>
    %62 = vector.shape_cast %61 : vector<8xf32> to vector<8x1xf32>
    %63 = tpu.reciprocal %62 {approx = true} : vector<8x1xf32> -> vector<8x1xf32>
    %64 = vector.broadcast %63 : vector<8x1xf32> to vector<8x8xf32>
    %65 = arith.mulf %60, %64 : vector<8x8xf32>
    %cst_40 = arith.constant dense<0.000000e+00> : vector<8x8xf32>
    %66 = tpu.matmul %65, %52, %cst_40 {dimension_numbers = #tpu.dot_dimension_numbers<[1], [0], [0], [1], [0, 0, 1, 1], [], []>} : vector<8x8xf32>, vector<8x8xf32>, vector<8x8xf32> -> vector<8x8xf32>
    %c0_41 = arith.constant 0 : index
    %c0_42 = arith.constant 0 : index
    %67 = vector.load %arg11[%c0_41, %c0_42] : memref<8x32xf32, #tpu.memory_space<vmem>>, vector<8x32xf32>
    %c8_43 = arith.constant 8 : index
    %c0_44 = arith.constant 0 : index
    %68 = vector.load %arg5[%c8_43, %c0_44] : memref<32x32xf32, #tpu.memory_space<vmem>>, vector<8x32xf32>
    %cst_45 = arith.constant dense<0.000000e+00> : vector<8x32xf32>
    %69 = tpu.matmul %66, %68, %cst_45 {dimension_numbers = #tpu.dot_dimension_numbers<[1], [0], [0], [1], [0, 0, 1, 1], [], []>} : vector<8x8xf32>, vector<8x32xf32>, vector<8x32xf32> -> vector<8x32xf32>
    %70 = arith.addf %67, %69 : vector<8x32xf32>
    %c0_46 = arith.constant 0 : index
    %c0_47 = arith.constant 0 : index
    %71 = vector.load %arg11[%c0_46, %c0_47] : memref<8x32xf32, #tpu.memory_space<vmem>>, vector<8x32xf32>
    tpu.vector_store %arg11[%c0_46, %c0_47], %70 {strides = array<i32>} : memref<8x32xf32, #tpu.memory_space<vmem>>, vector<8x32xf32>,
    %c0_48 = arith.constant 0 : index
    %c16 = arith.constant 16 : index
    %72 = vector.load %arg10[%c0_48, %c16] : memref<8x96xf32, #tpu.memory_space<vmem>>, vector<8x8xf32>
    %c0_49 = arith.constant 0 : index
    %c48 = arith.constant 48 : index
    %73 = vector.load %arg10[%c0_49, %c48] : memref<8x96xf32, #tpu.memory_space<vmem>>, vector<8x8xf32>
    %c0_50 = arith.constant 0 : index
    %c80 = arith.constant 80 : index
    %74 = vector.load %arg10[%c0_50, %c80] : memref<8x96xf32, #tpu.memory_space<vmem>>, vector<8x8xf32>
    %cst_51 = arith.constant dense<0.000000e+00> : vector<8x8xf32>
    %75 = tpu.matmul %72, %73, %cst_51 {dimension_numbers = #tpu.dot_dimension_numbers<[1], [1], [0], [0], [0, 0, 1, 0], [], []>} : vector<8x8xf32>, vector<8x8xf32>, vector<8x8xf32> -> vector<8x8xf32>
    %76 = vector.broadcast %25 : vector<1x8xf32> to vector<8x8xf32>
    %77 = arith.addf %75, %76 : vector<8x8xf32>
    %cst_52 = arith.constant dense<0xFF800000> : vector<8xf32>
    %78 = vector.multi_reduction <maximumf>, %77, %cst_52 [1] : vector<8x8xf32> to vector<8xf32>
    %79 = vector.shape_cast %78 : vector<8xf32> to vector<8x1xf32>
    %80 = vector.broadcast %79 : vector<8x1xf32> to vector<8x8xf32>
    %81 = arith.subf %77, %80 : vector<8x8xf32>
    %82 = math.exp %81 : vector<8x8xf32>
    %cst_53 = arith.constant dense<0.000000e+00> : vector<8xf32>
    %83 = vector.multi_reduction <add>, %82, %cst_53 [1] : vector<8x8xf32> to vector<8xf32>
    %84 = vector.shape_cast %83 : vector<8xf32> to vector<8x1xf32>
    %85 = tpu.reciprocal %84 {approx = true} : vector<8x1xf32> -> vector<8x1xf32>
    %86 = vector.broadcast %85 : vector<8x1xf32> to vector<8x8xf32>
    %87 = arith.mulf %82, %86 : vector<8x8xf32>
    %cst_54 = arith.constant dense<0.000000e+00> : vector<8x8xf32>
    %88 = tpu.matmul %87, %74, %cst_54 {dimension_numbers = #tpu.dot_dimension_numbers<[1], [0], [0], [1], [0, 0, 1, 1], [], []>} : vector<8x8xf32>, vector<8x8xf32>, vector<8x8xf32> -> vector<8x8xf32>
    %c0_55 = arith.constant 0 : index
    %c0_56 = arith.constant 0 : index
    %89 = vector.load %arg11[%c0_55, %c0_56] : memref<8x32xf32, #tpu.memory_space<vmem>>, vector<8x32xf32>
    %c16_57 = arith.constant 16 : index
    %c0_58 = arith.constant 0 : index
    %90 = vector.load %arg5[%c16_57, %c0_58] : memref<32x32xf32, #tpu.memory_space<vmem>>, vector<8x32xf32>
    %cst_59 = arith.constant dense<0.000000e+00> : vector<8x32xf32>
    %91 = tpu.matmul %88, %90, %cst_59 {dimension_numbers = #tpu.dot_dimension_numbers<[1], [0], [0], [1], [0, 0, 1, 1], [], []>} : vector<8x8xf32>, vector<8x32xf32>, vector<8x32xf32> -> vector<8x32xf32>
    %92 = arith.addf %89, %91 : vector<8x32xf32>
    %c0_60 = arith.constant 0 : index
    %c0_61 = arith.constant 0 : index
    %93 = vector.load %arg11[%c0_60, %c0_61] : memref<8x32xf32, #tpu.memory_space<vmem>>, vector<8x32xf32>
    tpu.vector_store %arg11[%c0_60, %c0_61], %92 {strides = array<i32>} : memref<8x32xf32, #tpu.memory_space<vmem>>, vector<8x32xf32>,
    %c0_62 = arith.constant 0 : index
    %c24 = arith.constant 24 : index
    %94 = vector.load %arg10[%c0_62, %c24] : memref<8x96xf32, #tpu.memory_space<vmem>>, vector<8x8xf32>
    %c0_63 = arith.constant 0 : index
    %c56 = arith.constant 56 : index
    %95 = vector.load %arg10[%c0_63, %c56] : memref<8x96xf32, #tpu.memory_space<vmem>>, vector<8x8xf32>
    %c0_64 = arith.constant 0 : index
    %c88 = arith.constant 88 : index
    %96 = vector.load %arg10[%c0_64, %c88] : memref<8x96xf32, #tpu.memory_space<vmem>>, vector<8x8xf32>
    %cst_65 = arith.constant dense<0.000000e+00> : vector<8x8xf32>
    %97 = tpu.matmul %94, %95, %cst_65 {dimension_numbers = #tpu.dot_dimension_numbers<[1], [1], [0], [0], [0, 0, 1, 0], [], []>} : vector<8x8xf32>, vector<8x8xf32>, vector<8x8xf32> -> vector<8x8xf32>
    %98 = vector.broadcast %25 : vector<1x8xf32> to vector<8x8xf32>
    %99 = arith.addf %97, %98 : vector<8x8xf32>
    %cst_66 = arith.constant dense<0xFF800000> : vector<8xf32>
    %100 = vector.multi_reduction <maximumf>, %99, %cst_66 [1] : vector<8x8xf32> to vector<8xf32>
    %101 = vector.shape_cast %100 : vector<8xf32> to vector<8x1xf32>
    %102 = vector.broadcast %101 : vector<8x1xf32> to vector<8x8xf32>
    %103 = arith.subf %99, %102 : vector<8x8xf32>
    %104 = math.exp %103 : vector<8x8xf32>
    %cst_67 = arith.constant dense<0.000000e+00> : vector<8xf32>
    %105 = vector.multi_reduction <add>, %104, %cst_67 [1] : vector<8x8xf32> to vector<8xf32>
    %106 = vector.shape_cast %105 : vector<8xf32> to vector<8x1xf32>
    %107 = tpu.reciprocal %106 {approx = true} : vector<8x1xf32> -> vector<8x1xf32>
    %108 = vector.broadcast %107 : vector<8x1xf32> to vector<8x8xf32>
    %109 = arith.mulf %104, %108 : vector<8x8xf32>
    %cst_68 = arith.constant dense<0.000000e+00> : vector<8x8xf32>
    %110 = tpu.matmul %109, %96, %cst_68 {dimension_numbers = #tpu.dot_dimension_numbers<[1], [0], [0], [1], [0, 0, 1, 1], [], []>} : vector<8x8xf32>, vector<8x8xf32>, vector<8x8xf32> -> vector<8x8xf32>
    %c0_69 = arith.constant 0 : index
    %c0_70 = arith.constant 0 : index
    %111 = vector.load %arg11[%c0_69, %c0_70] : memref<8x32xf32, #tpu.memory_space<vmem>>, vector<8x32xf32>
    %c24_71 = arith.constant 24 : index
    %c0_72 = arith.constant 0 : index
    %112 = vector.load %arg5[%c24_71, %c0_72] : memref<32x32xf32, #tpu.memory_space<vmem>>, vector<8x32xf32>
    %cst_73 = arith.constant dense<0.000000e+00> : vector<8x32xf32>
    %113 = tpu.matmul %110, %112, %cst_73 {dimension_numbers = #tpu.dot_dimension_numbers<[1], [0], [0], [1], [0, 0, 1, 1], [], []>} : vector<8x8xf32>, vector<8x32xf32>, vector<8x32xf32> -> vector<8x32xf32>
    %114 = arith.addf %111, %113 : vector<8x32xf32>
    %c0_74 = arith.constant 0 : index
    %c0_75 = arith.constant 0 : index
    %115 = vector.load %arg11[%c0_74, %c0_75] : memref<8x32xf32, #tpu.memory_space<vmem>>, vector<8x32xf32>
    tpu.vector_store %arg11[%c0_74, %c0_75], %114 {strides = array<i32>} : memref<8x32xf32, #tpu.memory_space<vmem>>, vector<8x32xf32>,
    %c0_76 = arith.constant 0 : index
    %c0_77 = arith.constant 0 : index
    %116 = vector.load %arg11[%c0_76, %c0_77] : memref<8x32xf32, #tpu.memory_space<vmem>>, vector<8x32xf32>
    %117 = arith.addf %1, %116 : vector<8x32xf32>
    %c0_78 = arith.constant 0 : index
    %c0_79 = arith.constant 0 : index
    %118 = vector.load %arg6[%c0_78, %c0_79] : memref<1x32xf32, #tpu.memory_space<vmem>>, vector<1x32xf32>
    %119 = vector.shape_cast %118 : vector<1x32xf32> to vector<32xf32>
    %120 = arith.mulf %117, %117 : vector<8x32xf32>
    %cst_80 = arith.constant dense<0.000000e+00> : vector<8xf32>
    %121 = vector.multi_reduction <add>, %120, %cst_80 [1] : vector<8x32xf32> to vector<8xf32>
    %122 = vector.shape_cast %121 : vector<8xf32> to vector<8x1xf32>
    %cst_81 = arith.constant 3.200000e+01 : f32
    %123 = vector.broadcast %cst_81 : f32 to vector<8x1xf32>
    %124 = arith.divf %122, %123 : vector<8x1xf32>
    %cst_82 = arith.constant 9.99999997E-7 : f32
    %125 = vector.broadcast %cst_82 : f32 to vector<8x1xf32>
    %126 = arith.addf %124, %125 : vector<8x1xf32>
    %127 = math.rsqrt %126 : vector<8x1xf32>
    %128 = vector.broadcast %127 : vector<8x1xf32> to vector<8x32xf32>
    %129 = arith.mulf %117, %128 : vector<8x32xf32>
    %130 = vector.shape_cast %119 : vector<32xf32> to vector<1x32xf32>
    %131 = vector.broadcast %130 : vector<1x32xf32> to vector<8x32xf32>
    %132 = arith.mulf %131, %129 : vector<8x32xf32>
    %cst_83 = arith.constant 0.000000e+00 : f32
    %133 = vector.broadcast %cst_83 : f32 to vector<8x32xf32>
    %c0_84 = arith.constant 0 : index
    %c0_85 = arith.constant 0 : index
    %134 = vector.load %arg11[%c0_84, %c0_85] : memref<8x32xf32, #tpu.memory_space<vmem>>, vector<8x32xf32>
    tpu.vector_store %arg11[%c0_84, %c0_85], %133 {strides = array<i32>} : memref<8x32xf32, #tpu.memory_space<vmem>>, vector<8x32xf32>,
    %c0_86 = arith.constant 0 : index
    %c0_87 = arith.constant 0 : index
    %135 = vector.load %arg7[%c0_86, %c0_87] : memref<32x64xf32, #tpu.memory_space<vmem>>, vector<32x64xf32>
    %cst_88 = arith.constant dense<0.000000e+00> : vector<8x64xf32>
    %136 = tpu.matmul %132, %135, %cst_88 {dimension_numbers = #tpu.dot_dimension_numbers<[1], [0], [0], [1], [0, 0, 1, 1], [], []>} : vector<8x32xf32>, vector<32x64xf32>, vector<8x64xf32> -> vector<8x64xf32>
    %cst_89 = arith.constant 0.000000e+00 : f32
    %137 = vector.broadcast %cst_89 : f32 to vector<8x64xf32>
    %138 = arith.maximumf %136, %137 : vector<8x64xf32>
    %c0_90 = arith.constant 0 : index
    %c0_91 = arith.constant 0 : index
    %139 = vector.load %arg11[%c0_90, %c0_91] : memref<8x32xf32, #tpu.memory_space<vmem>>, vector<8x32xf32>
    %c0_92 = arith.constant 0 : index
    %c0_93 = arith.constant 0 : index
    %140 = vector.load %arg8[%c0_92, %c0_93] : memref<64x32xf32, #tpu.memory_space<vmem>>, vector<64x32xf32>
    %cst_94 = arith.constant dense<0.000000e+00> : vector<8x32xf32>
    %141 = tpu.matmul %138, %140, %cst_94 {dimension_numbers = #tpu.dot_dimension_numbers<[1], [0], [0], [1], [0, 0, 1, 1], [], []>} : vector<8x64xf32>, vector<64x32xf32>, vector<8x32xf32> -> vector<8x32xf32>
    %142 = arith.addf %139, %141 : vector<8x32xf32>
    %c0_95 = arith.constant 0 : index
    %c0_96 = arith.constant 0 : index
    %143 = vector.load %arg11[%c0_95, %c0_96] : memref<8x32xf32, #tpu.memory_space<vmem>>, vector<8x32xf32>
    tpu.vector_store %arg11[%c0_95, %c0_96], %142 {strides = array<i32>} : memref<8x32xf32, #tpu.memory_space<vmem>>, vector<8x32xf32>,
    %c0_97 = arith.constant 0 : index
    %c0_98 = arith.constant 0 : index
    %144 = vector.load %arg11[%c0_97, %c0_98] : memref<8x32xf32, #tpu.memory_space<vmem>>, vector<8x32xf32>
    %145 = arith.addf %117, %144 : vector<8x32xf32>
    %c0_99 = arith.constant 0 : index
    %c0_100 = arith.constant 0 : index
    %c0_101 = arith.constant 0 : index
    %146 = vector.load %arg9[%c0_99, %c0_100, %c0_101] : memref<1x8x32xf32, #tpu.memory_space<vmem>>, vector<1x8x32xf32>
    %147 = vector.shape_cast %146 : vector<1x8x32xf32> to vector<8x32xf32>
    %148 = vector.shape_cast %145 : vector<8x32xf32> to vector<1x8x32xf32>
    tpu.vector_store %arg9[%c0_99, %c0_100, %c0_101], %148 {strides = array<i32>} : memref<1x8x32xf32, #tpu.memory_space<vmem>>, vector<1x8x32xf32>,
    return
  }
  func.func @transform_0(%arg0: i32) -> (i32, i32, i32) {
    %c0_i32 = arith.constant 0 : i32
    %c0_i32_0 = arith.constant 0 : i32
    %c0_i32_1 = arith.constant 0 : i32
    return %arg0, %c0_i32, %c0_i32_0 : i32, i32, i32
  }
  func.func @transform_1(%arg0: i32) -> (i32, i32, i32) {
    %c0_i32 = arith.constant 0 : i32
    %c0_i32_0 = arith.constant 0 : i32
    %c0_i32_1 = arith.constant 0 : i32
    return %arg0, %c0_i32, %c0_i32_0 : i32, i32, i32
  }
  func.func @transform_2(%arg0: i32) -> (i32, i32) {
    %c0_i32 = arith.constant 0 : i32
    %c0_i32_0 = arith.constant 0 : i32
    %c0_i32_1 = arith.constant 0 : i32
    return %c0_i32, %c0_i32_0 : i32, i32
  }
  func.func @transform_3(%arg0: i32) -> (i32, i32) {
    %c0_i32 = arith.constant 0 : i32
    %c0_i32_0 = arith.constant 0 : i32
    %c0_i32_1 = arith.constant 0 : i32
    return %c0_i32, %c0_i32_0 : i32, i32
  }
  func.func @transform_4(%arg0: i32) -> (i32, i32) {
    %c0_i32 = arith.constant 0 : i32
    %c0_i32_0 = arith.constant 0 : i32
    %c0_i32_1 = arith.constant 0 : i32
    return %c0_i32, %c0_i32_0 : i32, i32
  }
  func.func @transform_5(%arg0: i32) -> (i32, i32) {
    %c0_i32 = arith.constant 0 : i32
    %c0_i32_0 = arith.constant 0 : i32
    %c0_i32_1 = arith.constant 0 : i32
    return %c0_i32, %c0_i32_0 : i32, i32
  }
  func.func @transform_6(%arg0: i32) -> (i32, i32) {
    %c0_i32 = arith.constant 0 : i32
    %c0_i32_0 = arith.constant 0 : i32
    %c0_i32_1 = arith.constant 0 : i32
    return %c0_i32, %c0_i32_0 : i32, i32
  }
  func.func @transform_7(%arg0: i32) -> (i32, i32) {
    %c0_i32 = arith.constant 0 : i32
    %c0_i32_0 = arith.constant 0 : i32
    %c0_i32_1 = arith.constant 0 : i32
    return %c0_i32, %c0_i32_0 : i32, i32
  }
  func.func @transform_8(%arg0: i32) -> (i32, i32, i32) {
    %c0_i32 = arith.constant 0 : i32
    %c0_i32_0 = arith.constant 0 : i32
    %c0_i32_1 = arith.constant 0 : i32
    return %arg0, %c0_i32, %c0_i32_0 : i32, i32, i32
  }
}

</mosaic_0001>

<llo_original>
// kernel: tpu_custom_call.1
$region0: #{tpu_custom_call.1}
  #allocation0 [shape = 'u32[]', space=smem, size = 0x4, offset = 0x4, fixed_abs, tag = 'smem constant byte address 0x4 - core index']
  #allocation1 [shape = 'u32[72,128]{1,0:T(1,128)}', space=vmem, size = 0x9000, scoped, tag = 'internal scratch']
  #allocation2 [shape = 'f32[8,96]{1,0:T(8,128)}', space=vmem, size = 0x1000, scoped, tag = 'scratch operand']
  #allocation3 [shape = 'f32[8,32]{1,0:T(8,128)}', space=vmem, size = 0x1000, scoped, tag = 'scratch operand']
  %s0 = inlined_call_operand.hbm [shape: f32[2,8,32], index: 0, kind: input, shape index: {}]
  %s1 = inlined_call_operand.hbm [shape: f32[2,1,8], index: 1, kind: input, shape index: {}]
  %s2 = inlined_call_operand.vmem [shape: f32[1,32], index: 2, kind: input, shape index: {}]
  %s3 = inlined_call_operand.vmem [shape: f32[32,96], index: 3, kind: input, shape index: {}]
  %s4 = inlined_call_operand.vmem [shape: f32[32,32], index: 4, kind: input, shape index: {}]
  %s5 = inlined_call_operand.vmem [shape: f32[1,32], index: 5, kind: input, shape index: {}]
  %s6 = inlined_call_operand.vmem [shape: f32[32,64], index: 6, kind: input, shape index: {}]
  %s7 = inlined_call_operand.vmem [shape: f32[64,32], index: 7, kind: input, shape index: {}]
  %s8 = inlined_call_operand.hbm [shape: f32[2,8,32], index: 8, kind: output, shape index: {}]
  %s9 = sld [smem:[#allocation0]]
  $region73: #{tpu_custom_call.1} parent=0
    _
  %s11 = ssub.s32 1, %s9
  %s12 = scalar_select 0, %s11, %s9
  $region1: #{tpu_custom_call.1} parent=0
    #allocation4 [shape = 'u8[8192]{0}', space=vmem, size = 0x2000, scoped, tag = 'input window, operand 0']
    #allocation5 [shape = 's32[2]{0}', space=sflag, size = 0x8, scoped, tag = 'scoped memory for tpu_custom_call.1']
    #allocation6 [shape = 's32[2]{0}', space=sflag, size = 0x8, scoped, tag = 'scoped memory for tpu_custom_call.1']
    #allocation7 [shape = 'u8[1024]{0}', space=vmem, size = 0x400, scoped, tag = 'input window, operand 1']
    #allocation8 [shape = 's32[2]{0}', space=sflag, size = 0x8, scoped, tag = 'scoped memory for tpu_custom_call.1']
    #allocation9 [shape = 'u8[8192]{0}', space=vmem, size = 0x2000, scoped, tag = 'output window, operand 0']
    %13 = vsyncpa [#allocation5], 0
    %s14 = scalar_lea.sflag [#allocation5], 1
    %15 = vsyncpa %s14, 0
    %16 = vsyncpa [#allocation8], 0
    %s17 = scalar_lea.sflag [#allocation8], 1
    %18 = vsyncpa %s17, 0
    %19 = vsyncpa [#allocation6], 0
    %s20 = scalar_lea.sflag [#allocation6], 1
    %21 = vsyncpa %s20, 0
    loop: start=0, step=1, limit=4
    $region2: #{tpu_custom_call.1} parent=1 // loop_pre_header
      _
    $region3: #{tpu_custom_call.1} parent=1 // loop_header
      %s23 = sphi 0, %s27
      %p24 = scmp.ge.s32.totalorder %s23, 4
      %s33 = sphi 0, %s35
      %s36 = sphi 0, %s33
      %s37 = sphi 0, %s36
      %s53 = sphi 0, %s37
      %s59 = sphi 0, %s61
      %s62 = sphi 0, %s59
      %s63 = sphi 0, %s62
      %s79 = sphi 0, %s63
      %s83 = sphi 0, %s83
      %s85 = sphi 0, %s83
      %s86 = sphi 0, %s85
      %s100 = sphi 0, %s86
      %s104 = sphi 0, %s104
      %s106 = sphi 0, %s104
      %s107 = sphi 0, %s106
      %s121 = sphi 0, %s107
      %s125 = sphi 0, %s125
      %s127 = sphi 0, %s125
      %s128 = sphi 0, %s127
      %s142 = sphi 0, %s128
      %s146 = sphi 0, %s146
      %s148 = sphi 0, %s146
      %s149 = sphi 0, %s148
      %s163 = sphi 0, %s149
      %s167 = sphi 0, %s167
      %s169 = sphi 0, %s167
      %s170 = sphi 0, %s169
      %s184 = sphi 0, %s170
      %s188 = sphi 0, %s188
      %s190 = sphi 0, %s188
      %s191 = sphi 0, %s190
      %s205 = sphi 0, %s191
      %s211 = sphi 0, %s213
      %s214 = sphi 0, %s211
      %s215 = sphi 0, %s214
      %s231 = sphi 0, %s215
    $region4: #{tpu_custom_call.1} parent=1 // loop_header_branch
      %26 = sbr.rel (%p24) target = $region8
    $region5: #{tpu_custom_call.1} parent=1 // loop_body
      %s28 = ssub.s32 %s23, 1
      %s29 = ssub.s32 %s23, 2
      %s30 = sadd.s32 %s23, 1
      %s31 = ssub.s32 %s23, %s30
      %p32 = scmp.eq.s32.totalorder %s31, 0
      %s34 = sadd.s32 %s33, 1
      %s35 = scalar_select %p32, %s33, %s34
      %p38 = pneg %p32
      %p39 = scmp.eq.s32.totalorder %s23, 1
      %p40 = por %p38, %p39
      %p41 = scmp.ne.s32.totalorder %s33, %s36
      %p42 = scmp.eq.s32.totalorder %s23, 0
      %p43 = por %p41, %p42
      %p44 = scmp.ne.s32.totalorder %s33, %s36
      %p45 = scmp.eq.s32.totalorder %s28, 1
      %p46 = por %p44, %p45
      %p47 = scmp.ne.s32.totalorder %s36, %s37
      %p48 = scmp.eq.s32.totalorder %s28, 0
      %p49 = por %p47, %p48
      %p50 = scmp.ne.s32.totalorder %s36, %s37
      %p51 = scmp.eq.s32.totalorder %s29, 1
      %p52 = por %p50, %p51
      %p54 = scmp.ne.s32.totalorder %s37, %s53
      %p55 = scmp.eq.s32.totalorder %s29, 0
      %p56 = por %p54, %p55
      %s57 = ssub.s32 %s23, %s30
      %p58 = scmp.eq.s32.totalorder %s57, 0
      %s60 = sadd.s32 %s59, 1
      %s61 = scalar_select %p58, %s59, %s60
      %p64 = pneg %p58
      %p65 = scmp.eq.s32.totalorder %s23, 1
      %p66 = por %p64, %p65
      %p67 = scmp.ne.s32.totalorder %s59, %s62
      %p68 = scmp.eq.s32.totalorder %s23, 0
      %p69 = por %p67, %p68
      %p70 = scmp.ne.s32.totalorder %s59, %s62
      %p71 = scmp.eq.s32.totalorder %s28, 1
      %p72 = por %p70, %p71
      %p73 = scmp.ne.s32.totalorder %s62, %s63
      %p74 = scmp.eq.s32.totalorder %s28, 0
      %p75 = por %p73, %p74
      %p76 = scmp.ne.s32.totalorder %s62, %s63
      %p77 = scmp.eq.s32.totalorder %s29, 1
      %p78 = por %p76, %p77
      %p80 = scmp.ne.s32.totalorder %s63, %s79
      %p81 = scmp.eq.s32.totalorder %s29, 0
      %p82 = por %p80, %p81
      %s84 = sadd.s32 %s83, 1
      %p87 = scmp.eq.s32.totalorder %s23, 1
      %p88 = scmp.ne.s32.totalorder %s83, %s85
      %p89 = scmp.eq.s32.totalorder %s23, 0
      %p90 = por %p88, %p89
      %p91 = scmp.ne.s32.totalorder %s83, %s85
      %p92 = scmp.eq.s32.totalorder %s28, 1
      %p93 = por %p91, %p92
      %p94 = scmp.ne.s32.totalorder %s85, %s86
      %p95 = scmp.eq.s32.totalorder %s28, 0
      %p96 = por %p94, %p95
      %p97 = scmp.ne.s32.totalorder %s85, %s86
      %p98 = scmp.eq.s32.totalorder %s29, 1
      %p99 = por %p97, %p98
      %p101 = scmp.ne.s32.totalorder %s86, %s100
      %p102 = scmp.eq.s32.totalorder %s29, 0
      %p103 = por %p101, %p102
      %s105 = sadd.s32 %s104, 1
      %p108 = scmp.eq.s32.totalorder %s23, 1
      %p109 = scmp.ne.s32.totalorder %s104, %s106
      %p110 = scmp.eq.s32.totalorder %s23, 0
      %p111 = por %p109, %p110
      %p112 = scmp.ne.s32.totalorder %s104, %s106
      %p113 = scmp.eq.s32.totalorder %s28, 1
      %p114 = por %p112, %p113
      %p115 = scmp.ne.s32.totalorder %s106, %s107
      %p116 = scmp.eq.s32.totalorder %s28, 0
      %p117 = por %p115, %p116
      %p118 = scmp.ne.s32.totalorder %s106, %s107
      %p119 = scmp.eq.s32.totalorder %s29, 1
      %p120 = por %p118, %p119
      %p122 = scmp.ne.s32.totalorder %s107, %s121
      %p123 = scmp.eq.s32.totalorder %s29, 0
      %p124 = por %p122, %p123
      %s126 = sadd.s32 %s125, 1
      %p129 = scmp.eq.s32.totalorder %s23, 1
      %p130 = scmp.ne.s32.totalorder %s125, %s127
      %p131 = scmp.eq.s32.totalorder %s23, 0
      %p132 = por %p130, %p131
      %p133 = scmp.ne.s32.totalorder %s125, %s127
      %p134 = scmp.eq.s32.totalorder %s28, 1
      %p135 = por %p133, %p134
      %p136 = scmp.ne.s32.totalorder %s127, %s128
      %p137 = scmp.eq.s32.totalorder %s28, 0
      %p138 = por %p136, %p137
      %p139 = scmp.ne.s32.totalorder %s127, %s128
      %p140 = scmp.eq.s32.totalorder %s29, 1
      %p141 = por %p139, %p140
      %p143 = scmp.ne.s32.totalorder %s128, %s142
      %p144 = scmp.eq.s32.totalorder %s29, 0
      %p145 = por %p143, %p144
      %s147 = sadd.s32 %s146, 1
      %p150 = scmp.eq.s32.totalorder %s23, 1
      %p151 = scmp.ne.s32.totalorder %s146, %s148
      %p152 = scmp.eq.s32.totalorder %s23, 0
      %p153 = por %p151, %p152
      %p154 = scmp.ne.s32.totalorder %s146, %s148
      %p155 = scmp.eq.s32.totalorder %s28, 1
      %p156 = por %p154, %p155
      %p157 = scmp.ne.s32.totalorder %s148, %s149
      %p158 = scmp.eq.s32.totalorder %s28, 0
      %p159 = por %p157, %p158
      %p160 = scmp.ne.s32.totalorder %s148, %s149
      %p161 = scmp.eq.s32.totalorder %s29, 1
      %p162 = por %p160, %p161
      %p164 = scmp.ne.s32.totalorder %s149, %s163
      %p165 = scmp.eq.s32.totalorder %s29, 0
      %p166 = por %p164, %p165
      %s168 = sadd.s32 %s167, 1
      %p171 = scmp.eq.s32.totalorder %s23, 1
      %p172 = scmp.ne.s32.totalorder %s167, %s169
      %p173 = scmp.eq.s32.totalorder %s23, 0
      %p174 = por %p172, %p173
      %p175 = scmp.ne.s32.totalorder %s167, %s169
      %p176 = scmp.eq.s32.totalorder %s28, 1
      %p177 = por %p175, %p176
      %p178 = scmp.ne.s32.totalorder %s169, %s170
      %p179 = scmp.eq.s32.totalorder %s28, 0
      %p180 = por %p178, %p179
      %p181 = scmp.ne.s32.totalorder %s169, %s170
      %p182 = scmp.eq.s32.totalorder %s29, 1
      %p183 = por %p181, %p182
      %p185 = scmp.ne.s32.totalorder %s170, %s184
      %p186 = scmp.eq.s32.totalorder %s29, 0
      %p187 = por %p185, %p186
      %s189 = sadd.s32 %s188, 1
      %p192 = scmp.eq.s32.totalorder %s23, 1
      %p193 = scmp.ne.s32.totalorder %s188, %s190
      %p194 = scmp.eq.s32.totalorder %s23, 0
      %p195 = por %p193, %p194
      %p196 = scmp.ne.s32.totalorder %s188, %s190
      %p197 = scmp.eq.s32.totalorder %s28, 1
      %p198 = por %p196, %p197
      %p199 = scmp.ne.s32.totalorder %s190, %s191
      %p200 = scmp.eq.s32.totalorder %s28, 0
      %p201 = por %p199, %p200
      %p202 = scmp.ne.s32.totalorder %s190, %s191
      %p203 = scmp.eq.s32.totalorder %s29, 1
      %p204 = por %p202, %p203
      %p206 = scmp.ne.s32.totalorder %s191, %s205
      %p207 = scmp.eq.s32.totalorder %s29, 0
      %p208 = por %p206, %p207
      %s209 = ssub.s32 %s23, %s30
      %p210 = scmp.eq.s32.totalorder %s209, 0
      %s212 = sadd.s32 %s211, 1
      %s213 = scalar_select %p210, %s211, %s212
      %p216 = pneg %p210
      %p217 = scmp.eq.s32.totalorder %s23, 1
      %p218 = por %p216, %p217
      %p219 = scmp.ne.s32.totalorder %s211, %s214
      %p220 = scmp.eq.s32.totalorder %s23, 0
      %p221 = por %p219, %p220
      %p222 = scmp.ne.s32.totalorder %s211, %s214
      %p223 = scmp.eq.s32.totalorder %s28, 1
      %p224 = por %p222, %p223
      %p225 = scmp.ne.s32.totalorder %s214, %s215
      %p226 = scmp.eq.s32.totalorder %s28, 0
      %p227 = por %p225, %p226
      %p228 = scmp.ne.s32.totalorder %s214, %s215
      %p229 = scmp.eq.s32.totalorder %s29, 1
      %p230 = por %p228, %p229
      %p232 = scmp.ne.s32.totalorder %s215, %s231
      %p233 = scmp.eq.s32.totalorder %s29, 0
      %p234 = por %p232, %p233
      %p235 = scmp.le.s32.totalorder 1, %s23
      %p236 = scmp.lt.s32.totalorder %s23, 3
      %p237 = pnand %p235, %p236
      %p238 = pneg %p237
      // Predicated region
      $region9: #{tpu_custom_call.1} parent=5 // pred_check
        _
      $region10: #{tpu_custom_call.1} parent=5 // pred_check_branch
        %240 = sbr.rel (%p237) target = $region12
      $region11: #{tpu_custom_call.1} parent=5 // pred_region
        %s241 = ssub.s32 %s23, 1
        // Predicated region
        $region13: #{tpu_custom_call.1} parent=11 // pred_check
          %p242 = pneg %p96
        $region14: #{tpu_custom_call.1} parent=11 // pred_check_branch
          %244 = sbr.rel (%p242) target = $region16
        $region15: #{tpu_custom_call.1} parent=11 // pred_region
          _
        $region16: #{tpu_custom_call.1} parent=11 // pred_fallthru
          _
        // Predicated region
        $region17: #{tpu_custom_call.1} parent=11 // pred_check
          %p245 = pneg %p117
        $region18: #{tpu_custom_call.1} parent=11 // pred_check_branch
          %247 = sbr.rel (%p245) target = $region20
        $region19: #{tpu_custom_call.1} parent=11 // pred_region
          _
        $region20: #{tpu_custom_call.1} parent=11 // pred_fallthru
          _
        // Predicated region
        $region21: #{tpu_custom_call.1} parent=11 // pred_check
          %p248 = pneg %p138
        $region22: #{tpu_custom_call.1} parent=11 // pred_check_branch
          %250 = sbr.rel (%p248) target = $region24
        $region23: #{tpu_custom_call.1} parent=11 // pred_region
          _
        $region24: #{tpu_custom_call.1} parent=11 // pred_fallthru
          _
        // Predicated region
        $region25: #{tpu_custom_call.1} parent=11 // pred_check
          %p251 = pneg %p159
        $region26: #{tpu_custom_call.1} parent=11 // pred_check_branch
          %253 = sbr.rel (%p251) target = $region28
        $region27: #{tpu_custom_call.1} parent=11 // pred_region
          _
        $region28: #{tpu_custom_call.1} parent=11 // pred_fallthru
          _
        // Predicated region
        $region29: #{tpu_custom_call.1} parent=11 // pred_check
          %p254 = pneg %p180
        $region30: #{tpu_custom_call.1} parent=11 // pred_check_branch
          %256 = sbr.rel (%p254) target = $region32
        $region31: #{tpu_custom_call.1} parent=11 // pred_region
          _
        $region32: #{tpu_custom_call.1} parent=11 // pred_fallthru
          _
        // Predicated region
        $region33: #{tpu_custom_call.1} parent=11 // pred_check
          %p257 = pneg %p201
        $region34: #{tpu_custom_call.1} parent=11 // pred_check_branch
          %259 = sbr.rel (%p257) target = $region36
        $region35: #{tpu_custom_call.1} parent=11 // pred_region
          _
        $region36: #{tpu_custom_call.1} parent=11 // pred_fallthru
          _
      $region12: #{tpu_custom_call.1} parent=5 // pred_fallthru
        _
      %p260 = scmp.lt.s32.totalorder %s23, 2
      // Predicated region
      $region37: #{tpu_custom_call.1} parent=5 // pred_check
        %p261 = pneg %p260
      $region38: #{tpu_custom_call.1} parent=5 // pred_check_branch
        %263 = sbr.rel (%p261) target = $region40
      $region39: #{tpu_custom_call.1} parent=5 // pred_region
        // Predicated region
        $region41: #{tpu_custom_call.1} parent=39 // pred_check
          %p264 = pneg %p43
        $region42: #{tpu_custom_call.1} parent=39 // pred_check_branch
          %266 = sbr.rel (%p264) target = $region44
        $region43: #{tpu_custom_call.1} parent=39 // pred_region
          %s267 = sand.u32 %s33, 1
          %s268 = scalar_lea.sflag [#allocation5], %s267
          %s269 = sand.u32 %s33, 1
          %s270 = smul.addr %s269, 8
          %s271 = scalar_lea.vmem [#allocation4], %s270
          %273 = vsyncadd %s268, 0
          %s274 = smul.addr %s23, 8
          %s275 = scalar_lea.hbm %s0, %s274
          %s277 = sshll.u32 %s275, 4
          %s278 = int_to_ptr.hbm [resolvable:$true] %s277
          %s279 = sshll.u32 %s271, 4
          %s280 = int_to_ptr.vmem [resolvable:$true] %s279
          %282 = dma.hbm_to_vmem [thread:$0]  %s278, 128, %s280, %s268
        $region44: #{tpu_custom_call.1} parent=39 // pred_fallthru
          _
        // Predicated region
        $region45: #{tpu_custom_call.1} parent=39 // pred_check
          %p283 = pneg %p69
        $region46: #{tpu_custom_call.1} parent=39 // pred_check_branch
          %285 = sbr.rel (%p283) target = $region48
        $region47: #{tpu_custom_call.1} parent=39 // pred_region
          %s286 = sand.u32 %s59, 1
          %s287 = scalar_lea.sflag [#allocation8], %s286
          %s288 = sand.u32 %s59, 1
          %s289 = scalar_lea.vmem [#allocation7], %s288
          %291 = vsyncadd %s287, 0
          %s292 = scalar_lea.hbm %s1, %s23
          %s294 = sshll.u32 %s292, 4
          %s295 = int_to_ptr.hbm [resolvable:$true] %s294
          %s296 = sshll.u32 %s289, 4
          %s297 = int_to_ptr.vmem [resolvable:$true] %s296
          %299 = dma.hbm_to_vmem [thread:$0]  %s295, 16, %s297, %s287
        $region48: #{tpu_custom_call.1} parent=39 // pred_fallthru
          _
      $region40: #{tpu_custom_call.1} parent=5 // pred_fallthru
        _
      %p300 = scmp.le.s32.totalorder 1, %s23
      %p301 = scmp.lt.s32.totalorder %s23, 3
      %p302 = pnand %p300, %p301
      %p303 = pneg %p302
      // Predicated region
      $region49: #{tpu_custom_call.1} parent=5 // pred_check
        _
      $region50: #{tpu_custom_call.1} parent=5 // pred_check_branch
        %305 = sbr.rel (%p302) target = $region52
      $region51: #{tpu_custom_call.1} parent=5 // pred_region
        %s306 = ssub.s32 %s23, 1
        %s307 = sand.u32 %s36, 1
        %s308 = scalar_lea.sflag [#allocation5], %s307
        %s309 = sand.u32 %s36, 1
        %s310 = smul.addr %s309, 8
        %s311 = scalar_lea.vmem [#allocation4], %s310
        // Predicated region
        $region53: #{tpu_custom_call.1} parent=51 // pred_check
          %p312 = pneg %p49
        $region54: #{tpu_custom_call.1} parent=51 // pred_check_branch
          %314 = sbr.rel (%p312) target = $region56
        $region55: #{tpu_custom_call.1} parent=51 // pred_region
          %316 = dma.done %s308, 128
        $region56: #{tpu_custom_call.1} parent=51 // pred_fallthru
          _
        %s317 = sand.u32 %s62, 1
        %s318 = scalar_lea.sflag [#allocation8], %s317
        %s319 = sand.u32 %s62, 1
        %s320 = scalar_lea.vmem [#allocation7], %s319
        // Predicated region
        $region57: #{tpu_custom_call.1} parent=51 // pred_check
          %p321 = pneg %p75
        $region58: #{tpu_custom_call.1} parent=51 // pred_check_branch
          %323 = sbr.rel (%p321) target = $region60
        $region59: #{tpu_custom_call.1} parent=51 // pred_region
          %325 = dma.done %s318, 16
        $region60: #{tpu_custom_call.1} parent=51 // pred_fallthru
          _
        %s326 = sand.u32 %s36, 1
        %s327 = scalar_lea.sflag [#allocation5], %s326
        %s328 = sand.u32 %s36, 1
        %s329 = smul.addr %s328, 8
        %s330 = scalar_lea.vmem [#allocation4], %s329
        %p331 = pneg %p49
        %p332 = pneg %p46
        %s333 = sand.u32 %s62, 1
        %s334 = scalar_lea.sflag [#allocation8], %s333
        %s335 = sand.u32 %s62, 1
        %s336 = scalar_lea.vmem [#allocation7], %s335
        %p337 = pneg %p75
        %p338 = pneg %p72
        %p339 = pneg %p96
        %p340 = pneg %p93
        %p341 = pneg %p117
        %p342 = pneg %p114
        %p343 = pneg %p138
        %p344 = pneg %p135
        %p345 = pneg %p159
        %p346 = pneg %p156
        %p347 = pneg %p180
        %p348 = pneg %p177
        %p349 = pneg %p201
        %p350 = pneg %p198
        %p351 = pneg %p227
        %p352 = pneg %p224
        %s353 = sand.u32 %s214, 1
        %s354 = scalar_lea.sflag [#allocation6], %s353
        %s355 = sand.u32 %s214, 1
        %s356 = smul.addr %s355, 8
        %s357 = scalar_lea.vmem [#allocation9], %s356
        %v358 = vld [vmem:[%s311] sm:$0xff]
        %v359 = vld [vmem:[%s2] sm:$0x1]
        %v360 = vmul.f32 %v358, %v358
        %vm361 = vcmask 261120
        %v362 = vsel %vm361, %v360, 0.0
        %363 = vadd.xlane.f32.xlu0 %v362
        %v364 = vpop.xlane.xlu0 %363
        %v365 = vrcp.pop 32.0
        %v366 = vmul.f32 32.0, %v365
        %v367 = vsub.f32 1.0, %v366
        %v368 = vmul.f32 %v365, %v367
        %v369 = vadd.f32 %v365, %v368
        %vm370 = vweird.f32 %v365
        %v371 = vsel %vm370, %v365, %v369
        %v372 = vmul.f32 %v364, %v371
        %v373 = vadd.f32 %v372, 1e-06
        %v374 = vrsqrt.pop %v373
        %v375 = vmul.f32 %v374, %v373
        %v376 = vmul.f32 %v375, %v374
        %v377 = vmul.f32 0.5, %v376
        %v378 = vsub.f32 1.5, %v377
        %v379 = vmul.f32 %v374, %v378
        %vm380 = vweird.f32 %v373
        %vm381 = vweird.f32 %v374
        %vm382 = vmor %vm380, %vm381
        %v383 = vsel %vm382, %v374, %v379
        %v384 = vmul.f32 %v358, %v383
        %v386 = vperm.slane %v359, 0
        %v388 = vmul.f32 %v386, %v384
        %v389 = vld [vmem:[%s3] sm:$0xff]
        %v390 = vld [vmem:[%s3 + $0x8] sm:$0xff]
        %v391 = vld [vmem:[%s3 + $0x10] sm:$0xff]
        %v392 = vld [vmem:[%s3 + $0x18] sm:$0xff]
        %v394 = vsel %vm361, %v388, 0
        %396 = vmatpush.msra.mxu0 0.0
        %397 = vmatpush.msra.mxu0 0.0
        %398 = vmatpush.msra.mxu0 0.0
        %399 = vmatpush.msra.mxu0 0.0
        %400 = vmatpush.msra.mxu0 0.0
        %401 = vmatpush.msra.mxu0 0.0
        %402 = vmatpush.msra.mxu0 0.0
        %403 = vmatpush.msra.mxu0 0.0
        %404 = vmatpush.msra.mxu0 0.0
        %405 = vmatpush.msra.mxu0 0.0
        %406 = vmatpush.msra.mxu0 0.0
        %407 = vmatpush.msra.mxu0 0.0
        %408 = vmatpush.msra.mxu0 %v392
        %409 = vmatpush.msra.mxu0 %v391
        %410 = vmatpush.msra.mxu0 %v390
        %411 = vmatpush.msra.mxu0 %v389
        %412 = vmatmul.f32.gmra.mxu0 %v394
        %v413 = vpop.f32.mrf.mxu0
        %v414 = vadd.f32 0.0, %v413
        %415 = vdwg.mxu0
        %vm416 = vcmask 785408
        %417 = vst.msk [vmem:[#allocation2] sm:$0xff] %vm416, %v414
        %v418 = vld [vmem:[%s320] sm:$0x1]
        %v419 = vsub.f32 1.0, %v418
        %v420 = vmul.f32 %v419, -1e+09
        %421 = vst.msk [vmem:[#allocation3] sm:$0xff] %vm361, 0.0
        %v422 = vld [vmem:[#allocation2] sm:$0xff]
        %v424 = vperm.slane %v420, 0
        %427 = vrot.lane.b32.xlu0 %v422, 96
        %v428 = vpop.permute.xlu0 %427
        %vm429 = vcmask 64512
        %v430 = vsel %vm429, %v422, 0
        %v432 = vsel %vm429, %v428, 0
        %434 = vmatpush.xpose.msra.mxu0 0.0
        %435 = vmatpush.xpose.msra.mxu0 0.0
        %436 = vmatpush.xpose.msra.mxu0 0.0
        %437 = vmatpush.xpose.msra.mxu0 0.0
        %438 = vmatpush.xpose.msra.mxu0 0.0
        %439 = vmatpush.xpose.msra.mxu0 0.0
        %440 = vmatpush.xpose.msra.mxu0 0.0
        %441 = vmatpush.xpose.msra.mxu0 0.0
        %442 = vmatpush.xpose.msra.mxu0 0.0
        %443 = vmatpush.xpose.msra.mxu0 0.0
        %444 = vmatpush.xpose.msra.mxu0 0.0
        %445 = vmatpush.xpose.msra.mxu0 0.0
        %446 = vmatpush.xpose.msra.mxu0 0.0
        %447 = vmatpush.xpose.msra.mxu0 0.0
        %448 = vmatpush.xpose.msra.mxu0 0.0
        %449 = vmatpush.xpose.msra.mxu0 %v432
        %450 = vmatmul.f32.gmra.mxu0 %v430
        %v451 = vpop.f32.mrf.mxu0
        %v452 = vadd.f32 %v424, %v451
        %453 = vdwg.mxu0
        %v454 = vsel %vm429, %v452, -inf
        %455 = vmax.xlane.f32.xlu0 %v454
        %v456 = vpop.xlane.xlu0 %455
        %v457 = vsub.f32 %v452, %v456
        %v458 = vmul.f32 %v457, 1.442695
        %v459 = vpow.pop %v458
        %v460 = vsel %vm429, %v459, 0.0
        %461 = vadd.xlane.f32.xlu0 %v460
        %v462 = vpop.xlane.xlu0 %461
        %v463 = vrcp.pop %v462
        %v464 = vmul.f32 %v459, %v463
        %465 = vrot.lane.b32.xlu0 %v422, 64
        %v466 = vpop.permute.xlu0 %465
        %v469 = vsel %vm429, %v464, 0
        %471 = vmatpush.msra.mxu0 0.0
        %472 = vmatpush.msra.mxu0 0.0
        %473 = vmatpush.msra.mxu0 0.0
        %474 = vmatpush.msra.mxu0 0.0
        %475 = vmatpush.msra.mxu0 0.0
        %476 = vmatpush.msra.mxu0 0.0
        %477 = vmatpush.msra.mxu0 0.0
        %478 = vmatpush.msra.mxu0 0.0
        %479 = vmatpush.msra.mxu0 0.0
        %480 = vmatpush.msra.mxu0 0.0
        %481 = vmatpush.msra.mxu0 0.0
        %482 = vmatpush.msra.mxu0 0.0
        %483 = vmatpush.msra.mxu0 0.0
        %484 = vmatpush.msra.mxu0 0.0
        %485 = vmatpush.msra.mxu0 0.0
        %486 = vmatpush.msra.mxu0 %v466
        %487 = vmatmul.f32.gmra.mxu0 %v469
        %v488 = vpop.f32.mrf.mxu0
        %v489 = vadd.f32 0.0, %v488
        %490 = vdwg.mxu0
        %v491 = vld [vmem:[#allocation3] sm:$0xff]
        %v492 = vld [vmem:[%s4] sm:$0xff]
        %v494 = vsel %vm429, %v489, 0
        %496 = vmatpush.msra.mxu0 0.0
        %497 = vmatpush.msra.mxu0 0.0
        %498 = vmatpush.msra.mxu0 0.0
        %499 = vmatpush.msra.mxu0 0.0
        %500 = vmatpush.msra.mxu0 0.0
        %501 = vmatpush.msra.mxu0 0.0
        %502 = vmatpush.msra.mxu0 0.0
        %503 = vmatpush.msra.mxu0 0.0
        %504 = vmatpush.msra.mxu0 0.0
        %505 = vmatpush.msra.mxu0 0.0
        %506 = vmatpush.msra.mxu0 0.0
        %507 = vmatpush.msra.mxu0 0.0
        %508 = vmatpush.msra.mxu0 0.0
        %509 = vmatpush.msra.mxu0 0.0
        %510 = vmatpush.msra.mxu0 0.0
        %511 = vmatpush.msra.mxu0 %v492
        %512 = vmatmul.f32.gmra.mxu0 %v494
        %v513 = vpop.f32.mrf.mxu0
        %v514 = vadd.f32 0.0, %v513
        %515 = vdwg.mxu0
        %v516 = vadd.f32 %v491, %v514
        %517 = vst.msk [vmem:[#allocation3] sm:$0xff] %vm361, %v516
        %v518 = vld [vmem:[#allocation2] sm:$0xff]
        %520 = vrot.lane.b32.xlu0 %v518, 120
        %v521 = vpop.permute.xlu0 %520
        %522 = vrot.lane.b32.xlu0 %v518, 88
        %v523 = vpop.permute.xlu0 %522
        %v524 = vsel %vm429, %v521, 0
        %v526 = vsel %vm429, %v523, 0
        %528 = vmatpush.xpose.msra.mxu0 0.0
        %529 = vmatpush.xpose.msra.mxu0 0.0
        %530 = vmatpush.xpose.msra.mxu0 0.0
        %531 = vmatpush.xpose.msra.mxu0 0.0
        %532 = vmatpush.xpose.msra.mxu0 0.0
        %533 = vmatpush.xpose.msra.mxu0 0.0
        %534 = vmatpush.xpose.msra.mxu0 0.0
        %535 = vmatpush.xpose.msra.mxu0 0.0
        %536 = vmatpush.xpose.msra.mxu0 0.0
        %537 = vmatpush.xpose.msra.mxu0 0.0
        %538 = vmatpush.xpose.msra.mxu0 0.0
        %539 = vmatpush.xpose.msra.mxu0 0.0
        %540 = vmatpush.xpose.msra.mxu0 0.0
        %541 = vmatpush.xpose.msra.mxu0 0.0
        %542 = vmatpush.xpose.msra.mxu0 0.0
        %543 = vmatpush.xpose.msra.mxu0 %v526
        %544 = vmatmul.f32.gmra.mxu0 %v524
        %v545 = vpop.f32.mrf.mxu0
        %v546 = vadd.f32 %v424, %v545
        %547 = vdwg.mxu0
        %v548 = vsel %vm429, %v546, -inf
        %549 = vmax.xlane.f32.xlu0 %v548
        %v550 = vpop.xlane.xlu0 %549
        %v551 = vsub.f32 %v546, %v550
        %v552 = vmul.f32 %v551, 1.442695
        %v553 = vpow.pop %v552
        %v554 = vsel %vm429, %v553, 0.0
        %555 = vadd.xlane.f32.xlu0 %v554
        %v556 = vpop.xlane.xlu0 %555
        %v557 = vrcp.pop %v556
        %v558 = vmul.f32 %v553, %v557
        %559 = vrot.lane.b32.xlu0 %v518, 56
        %v560 = vpop.permute.xlu0 %559
        %v563 = vsel %vm429, %v558, 0
        %565 = vmatpush.msra.mxu0 0.0
        %566 = vmatpush.msra.mxu0 0.0
        %567 = vmatpush.msra.mxu0 0.0
        %568 = vmatpush.msra.mxu0 0.0
        %569 = vmatpush.msra.mxu0 0.0
        %570 = vmatpush.msra.mxu0 0.0
        %571 = vmatpush.msra.mxu0 0.0
        %572 = vmatpush.msra.mxu0 0.0
        %573 = vmatpush.msra.mxu0 0.0
        %574 = vmatpush.msra.mxu0 0.0
        %575 = vmatpush.msra.mxu0 0.0
        %576 = vmatpush.msra.mxu0 0.0
        %577 = vmatpush.msra.mxu0 0.0
        %578 = vmatpush.msra.mxu0 0.0
        %579 = vmatpush.msra.mxu0 0.0
        %580 = vmatpush.msra.mxu0 %v560
        %581 = vmatmul.f32.gmra.mxu0 %v563
        %v582 = vpop.f32.mrf.mxu0
        %v583 = vadd.f32 0.0, %v582
        %584 = vdwg.mxu0
        %v585 = vld [vmem:[#allocation3] sm:$0xff]
        %v586 = vld [vmem:[%s4 + $0x8] sm:$0xff]
        %v588 = vsel %vm429, %v583, 0
        %590 = vmatpush.msra.mxu0 0.0
        %591 = vmatpush.msra.mxu0 0.0
        %592 = vmatpush.msra.mxu0 0.0
        %593 = vmatpush.msra.mxu0 0.0
        %594 = vmatpush.msra.mxu0 0.0
        %595 = vmatpush.msra.mxu0 0.0
        %596 = vmatpush.msra.mxu0 0.0
        %597 = vmatpush.msra.mxu0 0.0
        %598 = vmatpush.msra.mxu0 0.0
        %599 = vmatpush.msra.mxu0 0.0
        %600 = vmatpush.msra.mxu0 0.0
        %601 = vmatpush.msra.mxu0 0.0
        %602 = vmatpush.msra.mxu0 0.0
        %603 = vmatpush.msra.mxu0 0.0
        %604 = vmatpush.msra.mxu0 0.0
        %605 = vmatpush.msra.mxu0 %v586
        %606 = vmatmul.f32.gmra.mxu0 %v588
        %v607 = vpop.f32.mrf.mxu0
        %v608 = vadd.f32 0.0, %v607
        %609 = vdwg.mxu0
        %v610 = vadd.f32 %v585, %v608
        %611 = vst.msk [vmem:[#allocation3] sm:$0xff] %vm361, %v610
        %v612 = vld [vmem:[#allocation2] sm:$0xff]
        %614 = vrot.lane.b32.xlu0 %v612, 112
        %v615 = vpop.permute.xlu0 %614
        %616 = vrot.lane.b32.xlu0 %v612, 80
        %v617 = vpop.permute.xlu0 %616
        %v618 = vsel %vm429, %v615, 0
        %v620 = vsel %vm429, %v617, 0
        %622 = vmatpush.xpose.msra.mxu0 0.0
        %623 = vmatpush.xpose.msra.mxu0 0.0
        %624 = vmatpush.xpose.msra.mxu0 0.0
        %625 = vmatpush.xpose.msra.mxu0 0.0
        %626 = vmatpush.xpose.msra.mxu0 0.0
        %627 = vmatpush.xpose.msra.mxu0 0.0
        %628 = vmatpush.xpose.msra.mxu0 0.0
        %629 = vmatpush.xpose.msra.mxu0 0.0
        %630 = vmatpush.xpose.msra.mxu0 0.0
        %631 = vmatpush.xpose.msra.mxu0 0.0
        %632 = vmatpush.xpose.msra.mxu0 0.0
        %633 = vmatpush.xpose.msra.mxu0 0.0
        %634 = vmatpush.xpose.msra.mxu0 0.0
        %635 = vmatpush.xpose.msra.mxu0 0.0
        %636 = vmatpush.xpose.msra.mxu0 0.0
        %637 = vmatpush.xpose.msra.mxu0 %v620
        %638 = vmatmul.f32.gmra.mxu0 %v618
        %v639 = vpop.f32.mrf.mxu0
        %v640 = vadd.f32 %v424, %v639
        %641 = vdwg.mxu0
        %v642 = vsel %vm429, %v640, -inf
        %643 = vmax.xlane.f32.xlu0 %v642
        %v644 = vpop.xlane.xlu0 %643
        %v645 = vsub.f32 %v640, %v644
        %v646 = vmul.f32 %v645, 1.442695
        %v647 = vpow.pop %v646
        %v648 = vsel %vm429, %v647, 0.0
        %649 = vadd.xlane.f32.xlu0 %v648
        %v650 = vpop.xlane.xlu0 %649
        %v651 = vrcp.pop %v650
        %v652 = vmul.f32 %v647, %v651
        %653 = vrot.lane.b32.xlu0 %v612, 48
        %v654 = vpop.permute.xlu0 %653
        %v657 = vsel %vm429, %v652, 0
        %659 = vmatpush.msra.mxu0 0.0
        %660 = vmatpush.msra.mxu0 0.0
        %661 = vmatpush.msra.mxu0 0.0
        %662 = vmatpush.msra.mxu0 0.0
        %663 = vmatpush.msra.mxu0 0.0
        %664 = vmatpush.msra.mxu0 0.0
        %665 = vmatpush.msra.mxu0 0.0
        %666 = vmatpush.msra.mxu0 0.0
        %667 = vmatpush.msra.mxu0 0.0
        %668 = vmatpush.msra.mxu0 0.0
        %669 = vmatpush.msra.mxu0 0.0
        %670 = vmatpush.msra.mxu0 0.0
        %671 = vmatpush.msra.mxu0 0.0
        %672 = vmatpush.msra.mxu0 0.0
        %673 = vmatpush.msra.mxu0 0.0
        %674 = vmatpush.msra.mxu0 %v654
        %675 = vmatmul.f32.gmra.mxu0 %v657
        %v676 = vpop.f32.mrf.mxu0
        %v677 = vadd.f32 0.0, %v676
        %678 = vdwg.mxu0
        %v679 = vld [vmem:[#allocation3] sm:$0xff]
        %v680 = vld [vmem:[%s4 + $0x10] sm:$0xff]
        %v682 = vsel %vm429, %v677, 0
        %684 = vmatpush.msra.mxu0 0.0
        %685 = vmatpush.msra.mxu0 0.0
        %686 = vmatpush.msra.mxu0 0.0
        %687 = vmatpush.msra.mxu0 0.0
        %688 = vmatpush.msra.mxu0 0.0
        %689 = vmatpush.msra.mxu0 0.0
        %690 = vmatpush.msra.mxu0 0.0
        %691 = vmatpush.msra.mxu0 0.0
        %692 = vmatpush.msra.mxu0 0.0
        %693 = vmatpush.msra.mxu0 0.0
        %694 = vmatpush.msra.mxu0 0.0
        %695 = vmatpush.msra.mxu0 0.0
        %696 = vmatpush.msra.mxu0 0.0
        %697 = vmatpush.msra.mxu0 0.0
        %698 = vmatpush.msra.mxu0 0.0
        %699 = vmatpush.msra.mxu0 %v680
        %700 = vmatmul.f32.gmra.mxu0 %v682
        %v701 = vpop.f32.mrf.mxu0
        %v702 = vadd.f32 0.0, %v701
        %703 = vdwg.mxu0
        %v704 = vadd.f32 %v679, %v702
        %705 = vst.msk [vmem:[#allocation3] sm:$0xff] %vm361, %v704
        %v706 = vld [vmem:[#allocation2] sm:$0xff]
        %708 = vrot.lane.b32.xlu0 %v706, 104
        %v709 = vpop.permute.xlu0 %708
        %710 = vrot.lane.b32.xlu0 %v706, 72
        %v711 = vpop.permute.xlu0 %710
        %v712 = vsel %vm429, %v709, 0
        %v714 = vsel %vm429, %v711, 0
        %716 = vmatpush.xpose.msra.mxu0 0.0
        %717 = vmatpush.xpose.msra.mxu0 0.0
        %718 = vmatpush.xpose.msra.mxu0 0.0
        %719 = vmatpush.xpose.msra.mxu0 0.0
        %720 = vmatpush.xpose.msra.mxu0 0.0
        %721 = vmatpush.xpose.msra.mxu0 0.0
        %722 = vmatpush.xpose.msra.mxu0 0.0
        %723 = vmatpush.xpose.msra.mxu0 0.0
        %724 = vmatpush.xpose.msra.mxu0 0.0
        %725 = vmatpush.xpose.msra.mxu0 0.0
        %726 = vmatpush.xpose.msra.mxu0 0.0
        %727 = vmatpush.xpose.msra.mxu0 0.0
        %728 = vmatpush.xpose.msra.mxu0 0.0
        %729 = vmatpush.xpose.msra.mxu0 0.0
        %730 = vmatpush.xpose.msra.mxu0 0.0
        %731 = vmatpush.xpose.msra.mxu0 %v714
        %732 = vmatmul.f32.gmra.mxu0 %v712
        %v733 = vpop.f32.mrf.mxu0
        %v734 = vadd.f32 %v424, %v733
        %735 = vdwg.mxu0
        %v736 = vsel %vm429, %v734, -inf
        %737 = vmax.xlane.f32.xlu0 %v736
        %v738 = vpop.xlane.xlu0 %737
        %v739 = vsub.f32 %v734, %v738
        %v740 = vmul.f32 %v739, 1.442695
        %v741 = vpow.pop %v740
        %v742 = vsel %vm429, %v741, 0.0
        %743 = vadd.xlane.f32.xlu0 %v742
        %v744 = vpop.xlane.xlu0 %743
        %v745 = vrcp.pop %v744
        %v746 = vmul.f32 %v741, %v745
        %747 = vrot.lane.b32.xlu0 %v706, 40
        %v748 = vpop.permute.xlu0 %747
        %v751 = vsel %vm429, %v746, 0
        %753 = vmatpush.msra.mxu0 0.0
        %754 = vmatpush.msra.mxu0 0.0
        %755 = vmatpush.msra.mxu0 0.0
        %756 = vmatpush.msra.mxu0 0.0
        %757 = vmatpush.msra.mxu0 0.0
        %758 = vmatpush.msra.mxu0 0.0
        %759 = vmatpush.msra.mxu0 0.0
        %760 = vmatpush.msra.mxu0 0.0
        %761 = vmatpush.msra.mxu0 0.0
        %762 = vmatpush.msra.mxu0 0.0
        %763 = vmatpush.msra.mxu0 0.0
        %764 = vmatpush.msra.mxu0 0.0
        %765 = vmatpush.msra.mxu0 0.0
        %766 = vmatpush.msra.mxu0 0.0
        %767 = vmatpush.msra.mxu0 0.0
        %768 = vmatpush.msra.mxu0 %v748
        %769 = vmatmul.f32.gmra.mxu0 %v751
        %v770 = vpop.f32.mrf.mxu0
        %v771 = vadd.f32 0.0, %v770
        %772 = vdwg.mxu0
        %v773 = vld [vmem:[#allocation3] sm:$0xff]
        %v774 = vld [vmem:[%s4 + $0x18] sm:$0xff]
        %v776 = vsel %vm429, %v771, 0
        %778 = vmatpush.msra.mxu0 0.0
        %779 = vmatpush.msra.mxu0 0.0
        %780 = vmatpush.msra.mxu0 0.0
        %781 = vmatpush.msra.mxu0 0.0
        %782 = vmatpush.msra.mxu0 0.0
        %783 = vmatpush.msra.mxu0 0.0
        %784 = vmatpush.msra.mxu0 0.0
        %785 = vmatpush.msra.mxu0 0.0
        %786 = vmatpush.msra.mxu0 0.0
        %787 = vmatpush.msra.mxu0 0.0
        %788 = vmatpush.msra.mxu0 0.0
        %789 = vmatpush.msra.mxu0 0.0
        %790 = vmatpush.msra.mxu0 0.0
        %791 = vmatpush.msra.mxu0 0.0
        %792 = vmatpush.msra.mxu0 0.0
        %793 = vmatpush.msra.mxu0 %v774
        %794 = vmatmul.f32.gmra.mxu0 %v776
        %v795 = vpop.f32.mrf.mxu0
        %v796 = vadd.f32 0.0, %v795
        %797 = vdwg.mxu0
        %v798 = vadd.f32 %v773, %v796
        %799 = vst.msk [vmem:[#allocation3] sm:$0xff] %vm361, %v798
        %v800 = vld [vmem:[#allocation3] sm:$0xff]
        %v801 = vadd.f32 %v358, %v800
        %v802 = vld [vmem:[%s5] sm:$0x1]
        %v803 = vmul.f32 %v801, %v801
        %v804 = vsel %vm361, %v803, 0.0
        %805 = vadd.xlane.f32.xlu0 %v804
        %v806 = vpop.xlane.xlu0 %805
        %v807 = vmul.f32 %v806, %v371
        %v808 = vadd.f32 %v807, 1e-06
        %v809 = vrsqrt.pop %v808
        %v810 = vmul.f32 %v809, %v808
        %v811 = vmul.f32 %v810, %v809
        %v812 = vmul.f32 0.5, %v811
        %v813 = vsub.f32 1.5, %v812
        %v814 = vmul.f32 %v809, %v813
        %vm815 = vweird.f32 %v808
        %vm816 = vweird.f32 %v809
        %vm817 = vmor %vm815, %vm816
        %v818 = vsel %vm817, %v809, %v814
        %v819 = vmul.f32 %v801, %v818
        %v821 = vperm.slane %v802, 0
        %v823 = vmul.f32 %v821, %v819
        %824 = vst.msk [vmem:[#allocation3] sm:$0xff] %vm361, 0.0
        %v825 = vld [vmem:[%s6] sm:$0xff]
        %v826 = vld [vmem:[%s6 + $0x8] sm:$0xff]
        %v827 = vld [vmem:[%s6 + $0x10] sm:$0xff]
        %v828 = vld [vmem:[%s6 + $0x18] sm:$0xff]
        %v830 = vsel %vm361, %v823, 0
        %832 = vmatpush.msra.mxu0 0.0
        %833 = vmatpush.msra.mxu0 0.0
        %834 = vmatpush.msra.mxu0 0.0
        %835 = vmatpush.msra.mxu0 0.0
        %836 = vmatpush.msra.mxu0 0.0
        %837 = vmatpush.msra.mxu0 0.0
        %838 = vmatpush.msra.mxu0 0.0
        %839 = vmatpush.msra.mxu0 0.0
        %840 = vmatpush.msra.mxu0 0.0
        %841 = vmatpush.msra.mxu0 0.0
        %842 = vmatpush.msra.mxu0 0.0
        %843 = vmatpush.msra.mxu0 0.0
        %844 = vmatpush.msra.mxu0 %v828
        %845 = vmatpush.msra.mxu0 %v827
        %846 = vmatpush.msra.mxu0 %v826
        %847 = vmatpush.msra.mxu0 %v825
        %848 = vmatmul.f32.gmra.mxu0 %v830
        %v849 = vpop.f32.mrf.mxu0
        %v850 = vadd.f32 0.0, %v849
        %851 = vdwg.mxu0
        %v852 = vmax.f32 %v850, 0.0
        %v853 = vld [vmem:[#allocation3] sm:$0xff]
        %v854 = vld [vmem:[%s7] sm:$0xff]
        %v855 = vld [vmem:[%s7 + $0x8] sm:$0xff]
        %v856 = vld [vmem:[%s7 + $0x10] sm:$0xff]
        %v857 = vld [vmem:[%s7 + $0x18] sm:$0xff]
        %v858 = vld [vmem:[%s7 + $0x20] sm:$0xff]
        %v859 = vld [vmem:[%s7 + $0x28] sm:$0xff]
        %v860 = vld [vmem:[%s7 + $0x30] sm:$0xff]
        %v861 = vld [vmem:[%s7 + $0x38] sm:$0xff]
        %vm862 = vcmask 523264
        %v864 = vsel %vm862, %v852, 0
        %866 = vmatpush.msra.mxu0 0.0
        %867 = vmatpush.msra.mxu0 0.0
        %868 = vmatpush.msra.mxu0 0.0
        %869 = vmatpush.msra.mxu0 0.0
        %870 = vmatpush.msra.mxu0 0.0
        %871 = vmatpush.msra.mxu0 0.0
        %872 = vmatpush.msra.mxu0 0.0
        %873 = vmatpush.msra.mxu0 0.0
        %874 = vmatpush.msra.mxu0 %v861
        %875 = vmatpush.msra.mxu0 %v860
        %876 = vmatpush.msra.mxu0 %v859
        %877 = vmatpush.msra.mxu0 %v858
        %878 = vmatpush.msra.mxu0 %v857
        %879 = vmatpush.msra.mxu0 %v856
        %880 = vmatpush.msra.mxu0 %v855
        %881 = vmatpush.msra.mxu0 %v854
        %882 = vmatmul.f32.gmra.mxu0 %v864
        %v883 = vpop.f32.mrf.mxu0
        %v884 = vadd.f32 0.0, %v883
        %885 = vdwg.mxu0
        %v886 = vadd.f32 %v853, %v884
        %887 = vst.msk [vmem:[#allocation3] sm:$0xff] %vm361, %v886
        %v888 = vld [vmem:[#allocation3] sm:$0xff]
        %v889 = vadd.f32 %v801, %v888
        %890 = vst.msk [vmem:[%s357] sm:$0xff] %vm361, %v889
        %s891 = sand.u32 %s214, 1
        %s892 = scalar_lea.sflag [#allocation6], %s891
        %s893 = sand.u32 %s214, 1
        %s894 = smul.addr %s893, 8
        %s895 = scalar_lea.vmem [#allocation9], %s894
        // Predicated region
        $region61: #{tpu_custom_call.1} parent=51 // pred_check
          %p896 = pneg %p224
        $region62: #{tpu_custom_call.1} parent=51 // pred_check_branch
          %898 = sbr.rel (%p896) target = $region64
        $region63: #{tpu_custom_call.1} parent=51 // pred_region
          %900 = vsyncadd %s892, 0
          %s901 = smul.addr %s28, 8
          %s902 = scalar_lea.hbm %s8, %s901
          %s904 = sshll.u32 %s895, 4
          %s905 = int_to_ptr.vmem [resolvable:$true] %s904
          %s906 = sshll.u32 %s902, 4
          %s907 = int_to_ptr.hbm [resolvable:$true] %s906
          %909 = dma.vmem_to_hbm [thread:$0]  %s905, 128, %s907, %s892
        $region64: #{tpu_custom_call.1} parent=51 // pred_fallthru
          _
      $region52: #{tpu_custom_call.1} parent=5 // pred_fallthru
        _
      %p910 = scmp.le.s32.totalorder 2, %s23
      // Predicated region
      $region65: #{tpu_custom_call.1} parent=5 // pred_check
        %p911 = pneg %p910
      $region66: #{tpu_custom_call.1} parent=5 // pred_check_branch
        %913 = sbr.rel (%p911) target = $region68
      $region67: #{tpu_custom_call.1} parent=5 // pred_region
        %s914 = ssub.s32 %s23, 2
        // Predicated region
        $region69: #{tpu_custom_call.1} parent=67 // pred_check
          %p915 = pneg %p230
        $region70: #{tpu_custom_call.1} parent=67 // pred_check_branch
          %917 = sbr.rel (%p915) target = $region72
        $region71: #{tpu_custom_call.1} parent=67 // pred_region
          %s918 = sand.u32 %s215, 1
          %s919 = scalar_lea.sflag [#allocation6], %s918
          %s920 = sand.u32 %s215, 1
          %s921 = smul.addr %s920, 8
          %s922 = scalar_lea.vmem [#allocation9], %s921
          %924 = dma.done %s919, 128
        $region72: #{tpu_custom_call.1} parent=67 // pred_fallthru
          _
      $region68: #{tpu_custom_call.1} parent=5 // pred_fallthru
        _
    $region6: #{tpu_custom_call.1} parent=1 // loop_footer
      %s27 = sadd.s32 1, %s23
    $region7: #{tpu_custom_call.1} parent=1 // loop_footer_branch
      %22 = sbr.rel target = $region3
    $region8: #{tpu_custom_call.1} parent=1 // loop_exit
      _
    %925 = vsyncpa [#allocation5], 1
    %s926 = scalar_lea.sflag [#allocation5], 1
    %927 = vsyncpa %s926, 1
    %928 = vsyncpa [#allocation8], 1
    %s929 = scalar_lea.sflag [#allocation8], 1
    %930 = vsyncpa %s929, 1
    %931 = vsyncpa [#allocation6], 1
    %s932 = scalar_lea.sflag [#allocation6], 1
    %933 = vsyncpa %s932, 1

</llo_original>
